<compile_context>
chip_gen: v6e
topology: v6e:2x2x1
jax: 0.10.0
libtpu: 0.0.40
codegen_flags: <defaults>
</compile_context>

<pallas_src>
import functools

import jax
import jax.numpy as jnp
from jax.experimental import pallas as pl
from jax.experimental.pallas import tpu as pltpu


def _fused_conv_bn_relu6_kernel(x_ref, w_ref, scale_ref, bias_ref, out_ref, *, TH, Wo, stride):
    """One grid step = (batch element n, output-row block rb).

    x_ref:     (Hp, Wp, Cin)    bf16  full padded image of this batch element (VMEM resident)
    w_ref:     (9, Cin, Coutp)  bf16  per-tap weights, tap index = kh*3 + kw
    scale_ref: (1, Coutp)       f32   folded BatchNorm scale
    bias_ref:  (1, Coutp)       f32   folded BatchNorm bias
    out_ref:   (TH, Wo, Coutp)  f32
    """
    rb = pl.program_id(1)
    cin = x_ref.shape[-1]
    coutp = w_ref.shape[-1]

    in_rows = (TH - 1) * stride + 3          # padded-input rows needed for TH output rows
    row_start = rb * (TH * stride)
    x_blk = x_ref[pl.ds(row_start, in_rows), :, :]           # (in_rows, Wp, Cin) bf16

    # 9 shifted tap matmuls accumulated in f32 (fused im2col).
    acc = jnp.zeros((TH * Wo, coutp), jnp.float32)
    for kh in range(3):
        for kw in range(3):
            tap = x_blk[kh:kh + (TH - 1) * stride + 1:stride,
                        kw:kw + (Wo - 1) * stride + 1:stride, :]     # (TH, Wo, Cin)
            acc = acc + jnp.dot(tap.reshape(TH * Wo, cin),
                                w_ref[kh * 3 + kw],
                                preferred_element_type=jnp.float32)

    y = acc * scale_ref[...] + bias_ref[...]                 # folded BatchNorm (inference)
    y = jnp.clip(y, 0.0, 6.0)                                # ReLU6
    out_ref[...] = y.reshape(TH, Wo, coutp).astype(out_ref.dtype)


def _pick_row_tile(Ho, Wo):
    # Target ~2048 output pixels per grid step; never exceed the full output height.
    target = 2048
    return max(1, min(Ho, max(1, target // max(1, Wo))))


@functools.partial(jax.jit, static_argnames=("stride",))
def conv2d_3x3_forward(x_nchw, conv_w, bn_gamma, bn_beta, bn_mean, bn_var, *, stride=1,
                       eps=1e-5):
    """x_nchw: (N, Cin, H, W); conv_w: (Cout, Cin, 3, 3) PyTorch OIHW. Returns NCHW f32."""
    N, Cin, H, W = x_nchw.shape
    Cout = conv_w.shape[0]

    Ho = (H + 2 - 3) // stride + 1
    Wo = (W + 2 - 3) // stride + 1
    Wp = W + 2

    TH = _pick_row_tile(Ho, Wo)
    n_rb = (Ho + TH - 1) // TH
    Ho_p = n_rb * TH                              # output rows padded to a multiple of TH
    Coutp = ((Cout + 127) // 128) * 128           # lane-dense output channels

    # ---- glue: layout + spatial zero padding (plain JAX; I/O stays NCHW to match PyTorch) ----
    x_nhwc = jnp.transpose(x_nchw, (0, 2, 3, 1)).astype(jnp.bfloat16)
    Hp = max(H + 2, (Ho_p - 1) * stride + 3)      # rows the kernel may touch (ragged last tile)
    xp = jnp.pad(x_nhwc, ((0, 0), (1, Hp - H - 1), (1, 1), (0, 0)))   # (N, Hp, Wp, Cin)

    # per-tap weights: OIHW -> (kh, kw, Cin, Cout) -> (9, Cin, Coutp), bf16 for the MXU
    w_taps = jnp.transpose(conv_w, (2, 3, 1, 0)).reshape(9, Cin, Cout)
    w_taps = jnp.pad(w_taps, ((0, 0), (0, 0), (0, Coutp - Cout))).astype(jnp.bfloat16)

    # fold BatchNorm (inference) into per-channel scale/bias, kept in f32
    inv_std = jax.lax.rsqrt(bn_var + eps)
    scale = (bn_gamma * inv_std).astype(jnp.float32)
    bias = (bn_beta - bn_mean * bn_gamma * inv_std).astype(jnp.float32)
    scale = jnp.pad(scale, (0, Coutp - Cout)).reshape(1, Coutp)
    bias = jnp.pad(bias, (0, Coutp - Cout)).reshape(1, Coutp)

    kernel = functools.partial(_fused_conv_bn_relu6_kernel, TH=TH, Wo=Wo, stride=stride)

    out = pl.pallas_call(
        kernel,
        out_shape=jax.ShapeDtypeStruct((N, Ho_p, Wo, Coutp), jnp.float32),
        grid_spec=pltpu.PrefetchScalarGridSpec(
            num_scalar_prefetch=0,
            grid=(N, n_rb),
            in_specs=[
                # full padded image per batch element; index unchanged along rb -> no re-DMA
                pl.BlockSpec((None, Hp, Wp, Cin), lambda n, rb: (n, 0, 0, 0)),
                pl.BlockSpec((9, Cin, Coutp), lambda n, rb: (0, 0, 0)),
                pl.BlockSpec((1, Coutp), lambda n, rb: (0, 0)),
                pl.BlockSpec((1, Coutp), lambda n, rb: (0, 0)),
            ],
            out_specs=pl.BlockSpec((None, TH, Wo, Coutp), lambda n, rb: (n, rb, 0, 0)),
        ),
        compiler_params=pltpu.CompilerParams(
            dimension_semantics=("parallel", "parallel"),
            vmem_limit_bytes=32 * 1024 * 1024,   # safe on v5e/v6e/v7x; footprint here is tiny
        ),
    )(xp, w_taps, scale, bias)

    # ---- glue: drop channel/row padding, back to NCHW ----
    out = out[:, :Ho, :, :Cout]
    return jnp.transpose(out, (0, 3, 1, 2))


def _reference(x_nchw, conv_w, bn_gamma, bn_beta, bn_mean, bn_var, stride, eps=1e-5):
    # Match the kernel's numerics: bf16-rounded conv operands, f32 accumulation.
    xr = x_nchw.astype(jnp.bfloat16).astype(jnp.float32)
    wr = conv_w.astype(jnp.bfloat16).astype(jnp.float32)
    y = jax.lax.conv_general_dilated(
        xr, wr, window_strides=(stride, stride), padding=((1, 1), (1, 1)),
        dimension_numbers=("NCHW", "OIHW", "NCHW"),
        precision=jax.lax.Precision.HIGHEST)
    inv_std = jax.lax.rsqrt(bn_var + eps)
    scale = (bn_gamma * inv_std).reshape(1, -1, 1, 1)
    bias = (bn_beta - bn_mean * bn_gamma * inv_std).reshape(1, -1, 1, 1)
    return jnp.clip(y * scale + bias, 0.0, 6.0)


if __name__ == "__main__":
    key = jax.random.PRNGKey(0)
    k_x, k_w, k_g, k_b, k_m, k_v = jax.random.split(key, 6)

    N, Cin, H, W = 2, 4, 16, 16
    Cout, stride = 8, 1

    x = jax.random.normal(k_x, (N, Cin, H, W), dtype=jnp.float32)

    # deterministic parameter init (shapes from nn.Conv2d(inp, oup, 3, stride, 1, bias=False)
    # and nn.BatchNorm2d(oup))
    fan_in = Cin * 3 * 3
    conv_w = jax.random.normal(k_w, (Cout, Cin, 3, 3), dtype=jnp.float32) * (2.0 / fan_in) ** 0.5
    bn_gamma = 1.0 + 0.1 * jax.random.normal(k_g, (Cout,), dtype=jnp.float32)
    bn_beta = 0.1 * jax.random.normal(k_b, (Cout,), dtype=jnp.float32)
    bn_mean = 0.1 * jax.random.normal(k_m, (Cout,), dtype=jnp.float32)
    bn_var = jnp.abs(jax.random.normal(k_v, (Cout,), dtype=jnp.float32)) + 0.5

    out = conv2d_3x3_forward(x, conv_w, bn_gamma, bn_beta, bn_mean, bn_var, stride=stride)
    out = jax.block_until_ready(out)
    assert out.shape == (N, Cout, H // stride, W // stride)

    ref = _reference(x, conv_w, bn_gamma, bn_beta, bn_mean, bn_var, stride)
    max_err = float(jnp.max(jnp.abs(out - ref)))
    assert jnp.allclose(out, ref, atol=3e-3, rtol=3e-3), f"mismatch vs reference (max err {max_err})"

    print("KERNEL_OK")
</pallas_src>

<mosaic_0001>
module attributes {stable_mosaic.version = 11 : i64} {
  func.func @_fused_conv_bn_relu6_kernel(%arg0: i32, %arg1: i32, %arg2: memref<1x18x18x4xbf16, #tpu.memory_space<vmem>>, %arg3: memref<9x4x128xbf16, #tpu.memory_space<vmem>>, %arg4: memref<1x128xf32, #tpu.memory_space<vmem>>, %arg5: memref<1x128xf32, #tpu.memory_space<vmem>>, %arg6: memref<1x16x16x128xf32, #tpu.memory_space<vmem>>) attributes {dimension_semantics = [#tpu.dimension_semantics<parallel>, #tpu.dimension_semantics<parallel>], iteration_bounds = array<i64: 2, 1>, scalar_prefetch = 0 : i64, scratch_operands = 0 : i64, tpu.core_type = #tpu.core_type<tc>, window_params = [{transform_indices = @transform_0, window_bounds = array<i64: 1, 18, 18, 4>}, {pipeline_mode = #tpu.pipeline_mode<synchronous>, transform_indices = @transform_1, window_bounds = array<i64: 9, 4, 128>}, {pipeline_mode = #tpu.pipeline_mode<synchronous>, transform_indices = @transform_2, window_bounds = array<i64: 1, 128>}, {pipeline_mode = #tpu.pipeline_mode<synchronous>, transform_indices = @transform_3, window_bounds = array<i64: 1, 128>}, {transform_indices = @transform_4, window_bounds = array<i64: 1, 16, 16, 128>}]} {
    %c16_i32 = arith.constant 16 : i32
    %0 = arith.muli %arg1, %c16_i32 : i32
    %c0 = arith.constant 0 : index
    %1 = arith.index_cast %0 : i32 to index
    %c0_0 = arith.constant 0 : index
    %c0_1 = arith.constant 0 : index
    %2 = vector.load %arg2[%c0, %1, %c0_0, %c0_1] : memref<1x18x18x4xbf16, #tpu.memory_space<vmem>>, vector<1x18x18x4xbf16>
    %3 = vector.shape_cast %2 : vector<1x18x18x4xbf16> to vector<18x18x4xbf16>
    %cst = arith.constant 0.000000e+00 : f32
    %4 = vector.broadcast %cst : f32 to vector<256x128xf32>
    %5 = vector.extract_strided_slice %3 {offsets = [0, 0, 0], sizes = [16, 16, 4], strides = [1, 1, 1]} : vector<18x18x4xbf16> to vector<16x16x4xbf16>
    %6 = vector.shape_cast %5 : vector<16x16x4xbf16> to vector<256x4xbf16>
    %c0_2 = arith.constant 0 : index
    %c0_3 = arith.constant 0 : index
    %c0_4 = arith.constant 0 : index
    %7 = vector.load %arg3[%c0_2, %c0_3, %c0_4] : memref<9x4x128xbf16, #tpu.memory_space<vmem>>, vector<1x4x128xbf16>
    %8 = vector.shape_cast %7 : vector<1x4x128xbf16> to vector<4x128xbf16>
    %cst_5 = arith.constant dense<0.000000e+00> : vector<256x128xf32>
    %9 = tpu.matmul %6, %8, %cst_5 {dimension_numbers = #tpu.dot_dimension_numbers<[1], [0], [0], [1], [0, 0, 1, 1], [], []>} : vector<256x4xbf16>, vector<4x128xbf16>, vector<256x128xf32> -> vector<256x128xf32>
    %10 = arith.addf %4, %9 : vector<256x128xf32>
    %11 = vector.extract_strided_slice %3 {offsets = [0, 1, 0], sizes = [16, 16, 4], strides = [1, 1, 1]} : vector<18x18x4xbf16> to vector<16x16x4xbf16>
    %12 = vector.shape_cast %11 : vector<16x16x4xbf16> to vector<256x4xbf16>
    %c1 = arith.constant 1 : index
    %c0_6 = arith.constant 0 : index
    %c0_7 = arith.constant 0 : index
    %13 = vector.load %arg3[%c1, %c0_6, %c0_7] : memref<9x4x128xbf16, #tpu.memory_space<vmem>>, vector<1x4x128xbf16>
    %14 = vector.shape_cast %13 : vector<1x4x128xbf16> to vector<4x128xbf16>
    %cst_8 = arith.constant dense<0.000000e+00> : vector<256x128xf32>
    %15 = tpu.matmul %12, %14, %cst_8 {dimension_numbers = #tpu.dot_dimension_numbers<[1], [0], [0], [1], [0, 0, 1, 1], [], []>} : vector<256x4xbf16>, vector<4x128xbf16>, vector<256x128xf32> -> vector<256x128xf32>
    %16 = arith.addf %10, %15 : vector<256x128xf32>
    %17 = vector.extract_strided_slice %3 {offsets = [0, 2, 0], sizes = [16, 16, 4], strides = [1, 1, 1]} : vector<18x18x4xbf16> to vector<16x16x4xbf16>
    %18 = vector.shape_cast %17 : vector<16x16x4xbf16> to vector<256x4xbf16>
    %c2 = arith.constant 2 : index
    %c0_9 = arith.constant 0 : index
    %c0_10 = arith.constant 0 : index
    %19 = vector.load %arg3[%c2, %c0_9, %c0_10] : memref<9x4x128xbf16, #tpu.memory_space<vmem>>, vector<1x4x128xbf16>
    %20 = vector.shape_cast %19 : vector<1x4x128xbf16> to vector<4x128xbf16>
    %cst_11 = arith.constant dense<0.000000e+00> : vector<256x128xf32>
    %21 = tpu.matmul %18, %20, %cst_11 {dimension_numbers = #tpu.dot_dimension_numbers<[1], [0], [0], [1], [0, 0, 1, 1], [], []>} : vector<256x4xbf16>, vector<4x128xbf16>, vector<256x128xf32> -> vector<256x128xf32>
    %22 = arith.addf %16, %21 : vector<256x128xf32>
    %23 = vector.extract_strided_slice %3 {offsets = [1, 0, 0], sizes = [16, 16, 4], strides = [1, 1, 1]} : vector<18x18x4xbf16> to vector<16x16x4xbf16>
    %24 = vector.shape_cast %23 : vector<16x16x4xbf16> to vector<256x4xbf16>
    %c3 = arith.constant 3 : index
    %c0_12 = arith.constant 0 : index
    %c0_13 = arith.constant 0 : index
    %25 = vector.load %arg3[%c3, %c0_12, %c0_13] : memref<9x4x128xbf16, #tpu.memory_space<vmem>>, vector<1x4x128xbf16>
    %26 = vector.shape_cast %25 : vector<1x4x128xbf16> to vector<4x128xbf16>
    %cst_14 = arith.constant dense<0.000000e+00> : vector<256x128xf32>
    %27 = tpu.matmul %24, %26, %cst_14 {dimension_numbers = #tpu.dot_dimension_numbers<[1], [0], [0], [1], [0, 0, 1, 1], [], []>} : vector<256x4xbf16>, vector<4x128xbf16>, vector<256x128xf32> -> vector<256x128xf32>
    %28 = arith.addf %22, %27 : vector<256x128xf32>
    %29 = vector.extract_strided_slice %3 {offsets = [1, 1, 0], sizes = [16, 16, 4], strides = [1, 1, 1]} : vector<18x18x4xbf16> to vector<16x16x4xbf16>
    %30 = vector.shape_cast %29 : vector<16x16x4xbf16> to vector<256x4xbf16>
    %c4 = arith.constant 4 : index
    %c0_15 = arith.constant 0 : index
    %c0_16 = arith.constant 0 : index
    %31 = vector.load %arg3[%c4, %c0_15, %c0_16] : memref<9x4x128xbf16, #tpu.memory_space<vmem>>, vector<1x4x128xbf16>
    %32 = vector.shape_cast %31 : vector<1x4x128xbf16> to vector<4x128xbf16>
    %cst_17 = arith.constant dense<0.000000e+00> : vector<256x128xf32>
    %33 = tpu.matmul %30, %32, %cst_17 {dimension_numbers = #tpu.dot_dimension_numbers<[1], [0], [0], [1], [0, 0, 1, 1], [], []>} : vector<256x4xbf16>, vector<4x128xbf16>, vector<256x128xf32> -> vector<256x128xf32>
    %34 = arith.addf %28, %33 : vector<256x128xf32>
    %35 = vector.extract_strided_slice %3 {offsets = [1, 2, 0], sizes = [16, 16, 4], strides = [1, 1, 1]} : vector<18x18x4xbf16> to vector<16x16x4xbf16>
    %36 = vector.shape_cast %35 : vector<16x16x4xbf16> to vector<256x4xbf16>
    %c5 = arith.constant 5 : index
    %c0_18 = arith.constant 0 : index
    %c0_19 = arith.constant 0 : index
    %37 = vector.load %arg3[%c5, %c0_18, %c0_19] : memref<9x4x128xbf16, #tpu.memory_space<vmem>>, vector<1x4x128xbf16>
    %38 = vector.shape_cast %37 : vector<1x4x128xbf16> to vector<4x128xbf16>
    %cst_20 = arith.constant dense<0.000000e+00> : vector<256x128xf32>
    %39 = tpu.matmul %36, %38, %cst_20 {dimension_numbers = #tpu.dot_dimension_numbers<[1], [0], [0], [1], [0, 0, 1, 1], [], []>} : vector<256x4xbf16>, vector<4x128xbf16>, vector<256x128xf32> -> vector<256x128xf32>
    %40 = arith.addf %34, %39 : vector<256x128xf32>
    %41 = vector.extract_strided_slice %3 {offsets = [2, 0, 0], sizes = [16, 16, 4], strides = [1, 1, 1]} : vector<18x18x4xbf16> to vector<16x16x4xbf16>
    %42 = vector.shape_cast %41 : vector<16x16x4xbf16> to vector<256x4xbf16>
    %c6 = arith.constant 6 : index
    %c0_21 = arith.constant 0 : index
    %c0_22 = arith.constant 0 : index
    %43 = vector.load %arg3[%c6, %c0_21, %c0_22] : memref<9x4x128xbf16, #tpu.memory_space<vmem>>, vector<1x4x128xbf16>
    %44 = vector.shape_cast %43 : vector<1x4x128xbf16> to vector<4x128xbf16>
    %cst_23 = arith.constant dense<0.000000e+00> : vector<256x128xf32>
    %45 = tpu.matmul %42, %44, %cst_23 {dimension_numbers = #tpu.dot_dimension_numbers<[1], [0], [0], [1], [0, 0, 1, 1], [], []>} : vector<256x4xbf16>, vector<4x128xbf16>, vector<256x128xf32> -> vector<256x128xf32>
    %46 = arith.addf %40, %45 : vector<256x128xf32>
    %47 = vector.extract_strided_slice %3 {offsets = [2, 1, 0], sizes = [16, 16, 4], strides = [1, 1, 1]} : vector<18x18x4xbf16> to vector<16x16x4xbf16>
    %48 = vector.shape_cast %47 : vector<16x16x4xbf16> to vector<256x4xbf16>
    %c7 = arith.constant 7 : index
    %c0_24 = arith.constant 0 : index
    %c0_25 = arith.constant 0 : index
    %49 = vector.load %arg3[%c7, %c0_24, %c0_25] : memref<9x4x128xbf16, #tpu.memory_space<vmem>>, vector<1x4x128xbf16>
    %50 = vector.shape_cast %49 : vector<1x4x128xbf16> to vector<4x128xbf16>
    %cst_26 = arith.constant dense<0.000000e+00> : vector<256x128xf32>
    %51 = tpu.matmul %48, %50, %cst_26 {dimension_numbers = #tpu.dot_dimension_numbers<[1], [0], [0], [1], [0, 0, 1, 1], [], []>} : vector<256x4xbf16>, vector<4x128xbf16>, vector<256x128xf32> -> vector<256x128xf32>
    %52 = arith.addf %46, %51 : vector<256x128xf32>
    %53 = vector.extract_strided_slice %3 {offsets = [2, 2, 0], sizes = [16, 16, 4], strides = [1, 1, 1]} : vector<18x18x4xbf16> to vector<16x16x4xbf16>
    %54 = vector.shape_cast %53 : vector<16x16x4xbf16> to vector<256x4xbf16>
    %c8 = arith.constant 8 : index
    %c0_27 = arith.constant 0 : index
    %c0_28 = arith.constant 0 : index
    %55 = vector.load %arg3[%c8, %c0_27, %c0_28] : memref<9x4x128xbf16, #tpu.memory_space<vmem>>, vector<1x4x128xbf16>
    %56 = vector.shape_cast %55 : vector<1x4x128xbf16> to vector<4x128xbf16>
    %cst_29 = arith.constant dense<0.000000e+00> : vector<256x128xf32>
    %57 = tpu.matmul %54, %56, %cst_29 {dimension_numbers = #tpu.dot_dimension_numbers<[1], [0], [0], [1], [0, 0, 1, 1], [], []>} : vector<256x4xbf16>, vector<4x128xbf16>, vector<256x128xf32> -> vector<256x128xf32>
    %58 = arith.addf %52, %57 : vector<256x128xf32>
    %c0_30 = arith.constant 0 : index
    %c0_31 = arith.constant 0 : index
    %59 = vector.load %arg4[%c0_30, %c0_31] : memref<1x128xf32, #tpu.memory_space<vmem>>, vector<1x128xf32>
    %60 = vector.broadcast %59 : vector<1x128xf32> to vector<256x128xf32>
    %61 = arith.mulf %58, %60 : vector<256x128xf32>
    %c0_32 = arith.constant 0 : index
    %c0_33 = arith.constant 0 : index
    %62 = vector.load %arg5[%c0_32, %c0_33] : memref<1x128xf32, #tpu.memory_space<vmem>>, vector<1x128xf32>
    %63 = vector.broadcast %62 : vector<1x128xf32> to vector<256x128xf32>
    %64 = arith.addf %61, %63 : vector<256x128xf32>
    %cst_34 = arith.constant 0.000000e+00 : f32
    %cst_35 = arith.constant 6.000000e+00 : f32
    %65 = vector.broadcast %cst_34 : f32 to vector<256x128xf32>
    %66 = arith.maximumf %65, %64 : vector<256x128xf32>
    %67 = vector.broadcast %cst_35 : f32 to vector<256x128xf32>
    %68 = arith.minimumf %67, %66 : vector<256x128xf32>
    %69 = vector.shape_cast %68 : vector<256x128xf32> to vector<16x16x128xf32>
    %c0_36 = arith.constant 0 : index
    %c0_37 = arith.constant 0 : index
    %c0_38 = arith.constant 0 : index
    %c0_39 = arith.constant 0 : index
    %70 = vector.load %arg6[%c0_36, %c0_37, %c0_38, %c0_39] : memref<1x16x16x128xf32, #tpu.memory_space<vmem>>, vector<1x16x16x128xf32>
    %71 = vector.shape_cast %70 : vector<1x16x16x128xf32> to vector<16x16x128xf32>
    %72 = vector.shape_cast %69 : vector<16x16x128xf32> to vector<1x16x16x128xf32>
    tpu.vector_store %arg6[%c0_36, %c0_37, %c0_38, %c0_39], %72 {strides = array<i32>} : memref<1x16x16x128xf32, #tpu.memory_space<vmem>>, vector<1x16x16x128xf32>,
    return
  }
  func.func @transform_0(%arg0: i32, %arg1: i32) -> (i32, i32, i32, i32) {
    %c0_i32 = arith.constant 0 : i32
    %c0_i32_0 = arith.constant 0 : i32
    %c0_i32_1 = arith.constant 0 : i32
    %c0_i32_2 = arith.constant 0 : i32
    return %arg0, %c0_i32, %c0_i32_0, %c0_i32_1 : i32, i32, i32, i32
  }
  func.func @transform_1(%arg0: i32, %arg1: i32) -> (i32, i32, i32) {
    %c0_i32 = arith.constant 0 : i32
    %c0_i32_0 = arith.constant 0 : i32
    %c0_i32_1 = arith.constant 0 : i32
    %c0_i32_2 = arith.constant 0 : i32
    return %c0_i32, %c0_i32_0, %c0_i32_1 : i32, i32, i32
  }
  func.func @transform_2(%arg0: i32, %arg1: i32) -> (i32, i32) {
    %c0_i32 = arith.constant 0 : i32
    %c0_i32_0 = arith.constant 0 : i32
    %c0_i32_1 = arith.constant 0 : i32
    return %c0_i32, %c0_i32_0 : i32, i32
  }
  func.func @transform_3(%arg0: i32, %arg1: i32) -> (i32, i32) {
    %c0_i32 = arith.constant 0 : i32
    %c0_i32_0 = arith.constant 0 : i32
    %c0_i32_1 = arith.constant 0 : i32
    return %c0_i32, %c0_i32_0 : i32, i32
  }
  func.func @transform_4(%arg0: i32, %arg1: i32) -> (i32, i32, i32, i32) {
    %c0_i32 = arith.constant 0 : i32
    %c0_i32_0 = arith.constant 0 : i32
    %c0_i32_1 = arith.constant 0 : i32
    return %arg0, %arg1, %c0_i32, %c0_i32_0 : i32, i32, i32, i32
  }
}

</mosaic_0001>

<llo_original>
// kernel: conv2d_3x3_forward.1
$region0: #{conv2d_3x3_forward.1}
  #allocation0 [shape = 'u32[]', space=smem, size = 0x4, offset = 0x4, fixed_abs, tag = 'smem constant byte address 0x4 - core index']
  #allocation1 [shape = 'u32[144,128]{1,0:T(1,128)}', space=vmem, size = 0x12000, scoped, tag = 'internal scratch']
  %s0 = inlined_call_operand.vmem [shape: bf16[2,18,18,4], index: 0, kind: input, shape index: {}]
  %s1 = inlined_call_operand.vmem [shape: bf16[9,4,128], index: 1, kind: input, shape index: {}]
  %s2 = inlined_call_operand.vmem [shape: f32[1,128], index: 2, kind: input, shape index: {}]
  %s3 = inlined_call_operand.vmem [shape: f32[1,128], index: 3, kind: input, shape index: {}]
  %s4 = inlined_call_operand.vmem [shape: f32[2,16,16,128], index: 4, kind: output, shape index: {}]
  %s5 = sld [smem:[#allocation0]]
  $region49: #{conv2d_3x3_forward.1} parent=0
    _
  %s7 = ssub.s32 1, %s5
  %s8 = scalar_select 0, %s7, %s5
  loop: start=0, step=1, limit=4
  $region2: #{conv2d_3x3_forward.1} parent=0 // loop_pre_header
    _
  $region3: #{conv2d_3x3_forward.1} parent=0 // loop_header
    %s10 = sphi 0, %s14
    %p11 = scmp.ge.s32.totalorder %s10, 4
    %s17 = sphi 0, %s29
    %s18 = sphi 0, %s25
    %s19 = sphi 0, %s17
    %s20 = sphi 0, %s18
    %s21 = sphi 0, %s19
    %s22 = sphi 0, %s20
    %s32 = sphi 0, %s34
    %s35 = sphi 0, %s32
    %s36 = sphi 0, %s35
    %s52 = sphi 0, %s36
    %s56 = sphi 0, %s56
    %s58 = sphi 0, %s56
    %s59 = sphi 0, %s58
    %s73 = sphi 0, %s59
    %s77 = sphi 0, %s77
    %s79 = sphi 0, %s77
    %s80 = sphi 0, %s79
    %s94 = sphi 0, %s80
    %s98 = sphi 0, %s98
    %s100 = sphi 0, %s98
    %s101 = sphi 0, %s100
    %s115 = sphi 0, %s101
    %s123 = sphi 0, %s125
    %s126 = sphi 0, %s123
    %s127 = sphi 0, %s126
    %s143 = sphi 0, %s127
  $region4: #{conv2d_3x3_forward.1} parent=0 // loop_header_branch
    %13 = sbr.rel (%p11) target = $region8
  $region5: #{conv2d_3x3_forward.1} parent=0 // loop_body
    %s15 = ssub.s32 %s10, 1
    %s16 = ssub.s32 %s10, 2
    %s23 = sadd.s32 1, %s18
    %p24 = scmp.ge.s32.totalorder %s23, 1
    %s25 = scalar_select %p24, 0, %s23
    %s26 = sadd.s32 1, %s17
    %s27 = scalar_select %p24, %s26, %s17
    %p28 = scmp.ge.s32.totalorder %s27, 2
    %s29 = scalar_select %p28, 0, %s27
    %s30 = ssub.s32 %s17, %s29
    %p31 = scmp.eq.s32.totalorder %s30, 0
    %s33 = sadd.s32 %s32, 1
    %s34 = scalar_select %p31, %s32, %s33
    %p37 = pneg %p31
    %p38 = scmp.eq.s32.totalorder %s10, 1
    %p39 = por %p37, %p38
    %p40 = scmp.ne.s32.totalorder %s32, %s35
    %p41 = scmp.eq.s32.totalorder %s10, 0
    %p42 = por %p40, %p41
    %p43 = scmp.ne.s32.totalorder %s32, %s35
    %p44 = scmp.eq.s32.totalorder %s15, 1
    %p45 = por %p43, %p44
    %p46 = scmp.ne.s32.totalorder %s35, %s36
    %p47 = scmp.eq.s32.totalorder %s15, 0
    %p48 = por %p46, %p47
    %p49 = scmp.ne.s32.totalorder %s35, %s36
    %p50 = scmp.eq.s32.totalorder %s16, 1
    %p51 = por %p49, %p50
    %p53 = scmp.ne.s32.totalorder %s36, %s52
    %p54 = scmp.eq.s32.totalorder %s16, 0
    %p55 = por %p53, %p54
    %s57 = sadd.s32 %s56, 1
    %p60 = scmp.eq.s32.totalorder %s10, 1
    %p61 = scmp.ne.s32.totalorder %s56, %s58
    %p62 = scmp.eq.s32.totalorder %s10, 0
    %p63 = por %p61, %p62
    %p64 = scmp.ne.s32.totalorder %s56, %s58
    %p65 = scmp.eq.s32.totalorder %s15, 1
    %p66 = por %p64, %p65
    %p67 = scmp.ne.s32.totalorder %s58, %s59
    %p68 = scmp.eq.s32.totalorder %s15, 0
    %p69 = por %p67, %p68
    %p70 = scmp.ne.s32.totalorder %s58, %s59
    %p71 = scmp.eq.s32.totalorder %s16, 1
    %p72 = por %p70, %p71
    %p74 = scmp.ne.s32.totalorder %s59, %s73
    %p75 = scmp.eq.s32.totalorder %s16, 0
    %p76 = por %p74, %p75
    %s78 = sadd.s32 %s77, 1
    %p81 = scmp.eq.s32.totalorder %s10, 1
    %p82 = scmp.ne.s32.totalorder %s77, %s79
    %p83 = scmp.eq.s32.totalorder %s10, 0
    %p84 = por %p82, %p83
    %p85 = scmp.ne.s32.totalorder %s77, %s79
    %p86 = scmp.eq.s32.totalorder %s15, 1
    %p87 = por %p85, %p86
    %p88 = scmp.ne.s32.totalorder %s79, %s80
    %p89 = scmp.eq.s32.totalorder %s15, 0
    %p90 = por %p88, %p89
    %p91 = scmp.ne.s32.totalorder %s79, %s80
    %p92 = scmp.eq.s32.totalorder %s16, 1
    %p93 = por %p91, %p92
    %p95 = scmp.ne.s32.totalorder %s80, %s94
    %p96 = scmp.eq.s32.totalorder %s16, 0
    %p97 = por %p95, %p96
    %s99 = sadd.s32 %s98, 1
    %p102 = scmp.eq.s32.totalorder %s10, 1
    %p103 = scmp.ne.s32.totalorder %s98, %s100
    %p104 = scmp.eq.s32.totalorder %s10, 0
    %p105 = por %p103, %p104
    %p106 = scmp.ne.s32.totalorder %s98, %s100
    %p107 = scmp.eq.s32.totalorder %s15, 1
    %p108 = por %p106, %p107
    %p109 = scmp.ne.s32.totalorder %s100, %s101
    %p110 = scmp.eq.s32.totalorder %s15, 0
    %p111 = por %p109, %p110
    %p112 = scmp.ne.s32.totalorder %s100, %s101
    %p113 = scmp.eq.s32.totalorder %s16, 1
    %p114 = por %p112, %p113
    %p116 = scmp.ne.s32.totalorder %s101, %s115
    %p117 = scmp.eq.s32.totalorder %s16, 0
    %p118 = por %p116, %p117
    %s119 = ssub.s32 %s17, %s29
    %s120 = ssub.s32 %s18, %s25
    %s121 = sor.u32 %s119, %s120
    %p122 = scmp.eq.s32.totalorder %s121, 0
    %s124 = sadd.s32 %s123, 1
    %s125 = scalar_select %p122, %s123, %s124
    %p128 = pneg %p122
    %p129 = scmp.eq.s32.totalorder %s10, 1
    %p130 = por %p128, %p129
    %p131 = scmp.ne.s32.totalorder %s123, %s126
    %p132 = scmp.eq.s32.totalorder %s10, 0
    %p133 = por %p131, %p132
    %p134 = scmp.ne.s32.totalorder %s123, %s126
    %p135 = scmp.eq.s32.totalorder %s15, 1
    %p136 = por %p134, %p135
    %p137 = scmp.ne.s32.totalorder %s126, %s127
    %p138 = scmp.eq.s32.totalorder %s15, 0
    %p139 = por %p137, %p138
    %p140 = scmp.ne.s32.totalorder %s126, %s127
    %p141 = scmp.eq.s32.totalorder %s16, 1
    %p142 = por %p140, %p141
    %p144 = scmp.ne.s32.totalorder %s127, %s143
    %p145 = scmp.eq.s32.totalorder %s16, 0
    %p146 = por %p144, %p145
    %p147 = scmp.le.s32.totalorder 1, %s10
    %p148 = scmp.lt.s32.totalorder %s10, 3
    %p149 = pnand %p147, %p148
    %p150 = pneg %p149
    // Predicated region
    $region9: #{conv2d_3x3_forward.1} parent=5 // pred_check
      _
    $region10: #{conv2d_3x3_forward.1} parent=5 // pred_check_branch
      %152 = sbr.rel (%p149) target = $region12
    $region11: #{conv2d_3x3_forward.1} parent=5 // pred_region
      %s153 = ssub.s32 %s10, 1
      // Predicated region
      $region13: #{conv2d_3x3_forward.1} parent=11 // pred_check
        %p154 = pneg %p69
      $region14: #{conv2d_3x3_forward.1} parent=11 // pred_check_branch
        %156 = sbr.rel (%p154) target = $region16
      $region15: #{conv2d_3x3_forward.1} parent=11 // pred_region
        _
      $region16: #{conv2d_3x3_forward.1} parent=11 // pred_fallthru
        _
      // Predicated region
      $region17: #{conv2d_3x3_forward.1} parent=11 // pred_check
        %p157 = pneg %p90
      $region18: #{conv2d_3x3_forward.1} parent=11 // pred_check_branch
        %159 = sbr.rel (%p157) target = $region20
      $region19: #{conv2d_3x3_forward.1} parent=11 // pred_region
        _
      $region20: #{conv2d_3x3_forward.1} parent=11 // pred_fallthru
        _
      // Predicated region
      $region21: #{conv2d_3x3_forward.1} parent=11 // pred_check
        %p160 = pneg %p111
      $region22: #{conv2d_3x3_forward.1} parent=11 // pred_check_branch
        %162 = sbr.rel (%p160) target = $region24
      $region23: #{conv2d_3x3_forward.1} parent=11 // pred_region
        _
      $region24: #{conv2d_3x3_forward.1} parent=11 // pred_fallthru
        _
    $region12: #{conv2d_3x3_forward.1} parent=5 // pred_fallthru
      _
    %p163 = scmp.lt.s32.totalorder %s10, 2
    // Predicated region
    $region25: #{conv2d_3x3_forward.1} parent=5 // pred_check
      %p164 = pneg %p163
    $region26: #{conv2d_3x3_forward.1} parent=5 // pred_check_branch
      %166 = sbr.rel (%p164) target = $region28
    $region27: #{conv2d_3x3_forward.1} parent=5 // pred_region
      // Predicated region
      $region29: #{conv2d_3x3_forward.1} parent=27 // pred_check
        %p167 = pneg %p42
      $region30: #{conv2d_3x3_forward.1} parent=27 // pred_check_branch
        %169 = sbr.rel (%p167) target = $region32
      $region31: #{conv2d_3x3_forward.1} parent=27 // pred_region
        %p170 = scmp.lt.s32.totalorder %s17, 1
        %s171 = scalar_select %p170, %s17, 1
        %s172 = smul.addr %s171, 54
        %s173 = smul.addr %s172, 4
        %s174 = scalar_lea.vmem %s0, %s173
      $region32: #{conv2d_3x3_forward.1} parent=27 // pred_fallthru
        _
    $region28: #{conv2d_3x3_forward.1} parent=5 // pred_fallthru
      _
    %p175 = scmp.le.s32.totalorder 1, %s10
    %p176 = scmp.lt.s32.totalorder %s10, 3
    %p177 = pnand %p175, %p176
    %p178 = pneg %p177
    // Predicated region
    $region33: #{conv2d_3x3_forward.1} parent=5 // pred_check
      _
    $region34: #{conv2d_3x3_forward.1} parent=5 // pred_check_branch
      %180 = sbr.rel (%p177) target = $region36
    $region35: #{conv2d_3x3_forward.1} parent=5 // pred_region
      %s181 = ssub.s32 %s10, 1
      %p182 = scmp.lt.s32.totalorder %s19, 1
      %s183 = scalar_select %p182, %s19, 1
      %s184 = smul.addr %s183, 54
      %s185 = smul.addr %s184, 4
      %s186 = scalar_lea.vmem %s0, %s185
      %p187 = pneg %p48
      %p188 = pneg %p45
      %p189 = pneg %p69
      %p190 = pneg %p66
      %p191 = pneg %p90
      %p192 = pneg %p87
      %p193 = pneg %p111
      %p194 = pneg %p108
      %p195 = pneg %p139
      %p196 = pneg %p136
      %s197 = smul.u32 16, %s20
      %p198 = scmp.lt.s32.totalorder %s19, 1
      %s199 = scalar_select %p198, %s19, 1
      %p200 = scmp.lt.s32.totalorder %s197, 15
      %s201 = scalar_select %p200, %s197, 15
      %s202 = smul.addr %s201, 2
      %s203 = smul.addr %s199, 32
      %s204 = sadd.s32 %s202, %s203
      %s205 = smul.addr %s204, 8
      %s206 = scalar_lea.vmem %s4, %s205
      %p207 = scmp.lt.s32.totalorder %s19, 1
      %s208 = scalar_select %p207, %s19, 1
      %s209 = smul.addr %s208, 54
      %s210 = smul.addr %s209, 4
      %s211 = scalar_lea.vmem %s0, %s210
      %s212 = smul.u32 16, %s20
      %p213 = scmp.lt.s32.totalorder %s19, 1
      %s214 = scalar_select %p213, %s19, 1
      %p215 = scmp.lt.s32.totalorder %s212, 15
      %s216 = scalar_select %p215, %s212, 15
      %s217 = smul.addr %s216, 2
      %s218 = smul.addr %s214, 32
      %s219 = sadd.s32 %s217, %s218
      %s220 = smul.addr %s219, 8
      %s221 = scalar_lea.vmem %s4, %s220
      %s222 = smul.u32 16, %s20
      %s224 = smul.u32 %s20, 16
      %s225 = smul.u32 %s224, 3
      %s226 = smul.addr %s225, 4
      %s227 = scalar_lea.vmem %s211, %s226
      %v228 = vld [vmem:[%s227] sm:$0xf]
      %v229 = vld [vmem:[%s227 + $0x4] sm:$0xf]
      %v230 = vld [vmem:[%s227 + $0x8] sm:$0x1]
      %v231 = vld [vmem:[%s227 + $0xc] sm:$0xf]
      %v232 = vld [vmem:[%s227 + $0x10] sm:$0xf]
      %v233 = vld [vmem:[%s227 + $0x14] sm:$0x1]
      %v234 = vld [vmem:[%s227 + $0x18] sm:$0xf]
      %v235 = vld [vmem:[%s227 + $0x1c] sm:$0xf]
      %v236 = vld [vmem:[%s227 + $0x20] sm:$0x1]
      %v237 = vld [vmem:[%s227 + $0x24] sm:$0xf]
      %v238 = vld [vmem:[%s227 + $0x28] sm:$0xf]
      %v239 = vld [vmem:[%s227 + $0x2c] sm:$0x1]
      %v240 = vld [vmem:[%s227 + $0x30] sm:$0xf]
      %v241 = vld [vmem:[%s227 + $0x34] sm:$0xf]
      %v242 = vld [vmem:[%s227 + $0x38] sm:$0x1]
      %v243 = vld [vmem:[%s227 + $0x3c] sm:$0xf]
      %v244 = vld [vmem:[%s227 + $0x40] sm:$0xf]
      %v245 = vld [vmem:[%s227 + $0x44] sm:$0x1]
      %v246 = vld [vmem:[%s227 + $0x48] sm:$0xf]
      %v247 = vld [vmem:[%s227 + $0x4c] sm:$0xf]
      %v248 = vld [vmem:[%s227 + $0x50] sm:$0x1]
      %v249 = vld [vmem:[%s227 + $0x54] sm:$0xf]
      %v250 = vld [vmem:[%s227 + $0x58] sm:$0xf]
      %v251 = vld [vmem:[%s227 + $0x5c] sm:$0x1]
      %v252 = vld [vmem:[%s227 + $0x60] sm:$0xf]
      %v253 = vld [vmem:[%s227 + $0x64] sm:$0xf]
      %v254 = vld [vmem:[%s227 + $0x68] sm:$0x1]
      %v255 = vld [vmem:[%s227 + $0x6c] sm:$0xf]
      %v256 = vld [vmem:[%s227 + $0x70] sm:$0xf]
      %v257 = vld [vmem:[%s227 + $0x74] sm:$0x1]
      %v258 = vld [vmem:[%s227 + $0x78] sm:$0xf]
      %v259 = vld [vmem:[%s227 + $0x7c] sm:$0xf]
      %v260 = vld [vmem:[%s227 + $0x80] sm:$0x1]
      %v261 = vld [vmem:[%s227 + $0x84] sm:$0xf]
      %v262 = vld [vmem:[%s227 + $0x88] sm:$0xf]
      %v263 = vld [vmem:[%s227 + $0x8c] sm:$0x1]
      %v264 = vld [vmem:[%s227 + $0x90] sm:$0xf]
      %v265 = vld [vmem:[%s227 + $0x94] sm:$0xf]
      %v266 = vld [vmem:[%s227 + $0x98] sm:$0x1]
      %v267 = vld [vmem:[%s227 + $0x9c] sm:$0xf]
      %v268 = vld [vmem:[%s227 + $0xa0] sm:$0xf]
      %v269 = vld [vmem:[%s227 + $0xa4] sm:$0x1]
      %v270 = vld [vmem:[%s227 + $0xa8] sm:$0xf]
      %v271 = vld [vmem:[%s227 + $0xac] sm:$0xf]
      %v272 = vld [vmem:[%s227 + $0xb0] sm:$0x1]
      %v273 = vld [vmem:[%s227 + $0xb4] sm:$0xf]
      %v274 = vld [vmem:[%s227 + $0xb8] sm:$0xf]
      %v275 = vld [vmem:[%s227 + $0xbc] sm:$0x1]
      %v276 = vld [vmem:[%s227 + $0xc0] sm:$0xf]
      %v277 = vld [vmem:[%s227 + $0xc4] sm:$0xf]
      %v278 = vld [vmem:[%s227 + $0xc8] sm:$0x1]
      %v279 = vld [vmem:[%s227 + $0xcc] sm:$0xf]
      %v280 = vld [vmem:[%s227 + $0xd0] sm:$0xf]
      %v281 = vld [vmem:[%s227 + $0xd4] sm:$0x1]
      %v282 = vld [vmem:[%s1] sm:$0x3]
      %vm283 = vsmask.f32 3328
      %vm284 = vsmask.f32 7440
      %vm285 = vmor %vm283, %vm284
      %v287 = vshrl.u32 %v228, 16
      %v289 = vrot.slane %v287, 4
      %v290 = vshll.u32 %v228, 16
      %v292 = vrot.slane %v290, 5
      %v293 = vor.u32 %v289, %v292
      %v294 = vrot.slane %v293, 4
      %v296 = vshll.u32 %v229, 16
      %v298 = vrot.slane %v296, 5
      %v299 = vsel %vm285, %v294, %v298
      %v300 = vshrl.u32 %v229, 16
      %v302 = vrot.slane %v300, 4
      %v303 = vor.u32 %v302, %v298
      %v304 = vrot.slane %v303, 4
      %v306 = vshll.u32 %v230, 16
      %v308 = vrot.slane %v306, 5
      %v309 = vsel %vm285, %v304, %v308
      %v311 = vshrl.u32 %v231, 16
      %v313 = vrot.slane %v311, 4
      %v314 = vshll.u32 %v231, 16
      %v316 = vrot.slane %v314, 5
      %v317 = vor.u32 %v313, %v316
      %v318 = vrot.slane %v317, 4
      %v320 = vshll.u32 %v232, 16
      %v322 = vrot.slane %v320, 5
      %v323 = vsel %vm285, %v318, %v322
      %v324 = vshrl.u32 %v232, 16
      %v326 = vrot.slane %v324, 4
      %v327 = vor.u32 %v326, %v322
      %v328 = vrot.slane %v327, 4
      %v330 = vshll.u32 %v233, 16
      %v332 = vrot.slane %v330, 5
      %v333 = vsel %vm285, %v328, %v332
      %v335 = vshrl.u32 %v234, 16
      %v337 = vrot.slane %v335, 4
      %v338 = vshll.u32 %v234, 16
      %v340 = vrot.slane %v338, 5
      %v341 = vor.u32 %v337, %v340
      %v342 = vrot.slane %v341, 4
      %v344 = vshll.u32 %v235, 16
      %v346 = vrot.slane %v344, 5
      %v347 = vsel %vm285, %v342, %v346
      %v348 = vshrl.u32 %v235, 16
      %v350 = vrot.slane %v348, 4
      %v351 = vor.u32 %v350, %v346
      %v352 = vrot.slane %v351, 4
      %v354 = vshll.u32 %v236, 16
      %v356 = vrot.slane %v354, 5
      %v357 = vsel %vm285, %v352, %v356
      %v359 = vshrl.u32 %v237, 16
      %v361 = vrot.slane %v359, 4
      %v362 = vshll.u32 %v237, 16
      %v364 = vrot.slane %v362, 5
      %v365 = vor.u32 %v361, %v364
      %v366 = vrot.slane %v365, 4
      %v368 = vshll.u32 %v238, 16
      %v370 = vrot.slane %v368, 5
      %v371 = vsel %vm285, %v366, %v370
      %v372 = vshrl.u32 %v238, 16
      %v374 = vrot.slane %v372, 4
      %v375 = vor.u32 %v374, %v370
      %v376 = vrot.slane %v375, 4
      %v378 = vshll.u32 %v239, 16
      %v380 = vrot.slane %v378, 5
      %v381 = vsel %vm285, %v376, %v380
      %v383 = vshrl.u32 %v240, 16
      %v385 = vrot.slane %v383, 4
      %v386 = vshll.u32 %v240, 16
      %v388 = vrot.slane %v386, 5
      %v389 = vor.u32 %v385, %v388
      %v390 = vrot.slane %v389, 4
      %v392 = vshll.u32 %v241, 16
      %v394 = vrot.slane %v392, 5
      %v395 = vsel %vm285, %v390, %v394
      %v396 = vshrl.u32 %v241, 16
      %v398 = vrot.slane %v396, 4
      %v399 = vor.u32 %v398, %v394
      %v400 = vrot.slane %v399, 4
      %v402 = vshll.u32 %v242, 16
      %v404 = vrot.slane %v402, 5
      %v405 = vsel %vm285, %v400, %v404
      %v407 = vshrl.u32 %v243, 16
      %v409 = vrot.slane %v407, 4
      %v410 = vshll.u32 %v243, 16
      %v412 = vrot.slane %v410, 5
      %v413 = vor.u32 %v409, %v412
      %v414 = vrot.slane %v413, 4
      %v416 = vshll.u32 %v244, 16
      %v418 = vrot.slane %v416, 5
      %v419 = vsel %vm285, %v414, %v418
      %v420 = vshrl.u32 %v244, 16
      %v422 = vrot.slane %v420, 4
      %v423 = vor.u32 %v422, %v418
      %v424 = vrot.slane %v423, 4
      %v426 = vshll.u32 %v245, 16
      %v428 = vrot.slane %v426, 5
      %v429 = vsel %vm285, %v424, %v428
      %v431 = vshrl.u32 %v246, 16
      %v433 = vrot.slane %v431, 4
      %v434 = vshll.u32 %v246, 16
      %v436 = vrot.slane %v434, 5
      %v437 = vor.u32 %v433, %v436
      %v438 = vrot.slane %v437, 4
      %v440 = vshll.u32 %v247, 16
      %v442 = vrot.slane %v440, 5
      %v443 = vsel %vm285, %v438, %v442
      %v444 = vshrl.u32 %v247, 16
      %v446 = vrot.slane %v444, 4
      %v447 = vor.u32 %v446, %v442
      %v448 = vrot.slane %v447, 4
      %v450 = vshll.u32 %v248, 16
      %v452 = vrot.slane %v450, 5
      %v453 = vsel %vm285, %v448, %v452
      %v455 = vshrl.u32 %v249, 16
      %v457 = vrot.slane %v455, 4
      %v458 = vshll.u32 %v249, 16
      %v460 = vrot.slane %v458, 5
      %v461 = vor.u32 %v457, %v460
      %v462 = vrot.slane %v461, 4
      %v464 = vshll.u32 %v250, 16
      %v466 = vrot.slane %v464, 5
      %v467 = vsel %vm285, %v462, %v466
      %v468 = vshrl.u32 %v250, 16
      %v470 = vrot.slane %v468, 4
      %v471 = vor.u32 %v470, %v466
      %v472 = vrot.slane %v471, 4
      %v474 = vshll.u32 %v251, 16
      %v476 = vrot.slane %v474, 5
      %v477 = vsel %vm285, %v472, %v476
      %v479 = vshrl.u32 %v252, 16
      %v481 = vrot.slane %v479, 4
      %v482 = vshll.u32 %v252, 16
      %v484 = vrot.slane %v482, 5
      %v485 = vor.u32 %v481, %v484
      %v486 = vrot.slane %v485, 4
      %v488 = vshll.u32 %v253, 16
      %v490 = vrot.slane %v488, 5
      %v491 = vsel %vm285, %v486, %v490
      %v492 = vshrl.u32 %v253, 16
      %v494 = vrot.slane %v492, 4
      %v495 = vor.u32 %v494, %v490
      %v496 = vrot.slane %v495, 4
      %v498 = vshll.u32 %v254, 16
      %v500 = vrot.slane %v498, 5
      %v501 = vsel %vm285, %v496, %v500
      %v503 = vshrl.u32 %v255, 16
      %v505 = vrot.slane %v503, 4
      %v506 = vshll.u32 %v255, 16
      %v508 = vrot.slane %v506, 5
      %v509 = vor.u32 %v505, %v508
      %v510 = vrot.slane %v509, 4
      %v512 = vshll.u32 %v256, 16
      %v514 = vrot.slane %v512, 5
      %v515 = vsel %vm285, %v510, %v514
      %v516 = vshrl.u32 %v256, 16
      %v518 = vrot.slane %v516, 4
      %v519 = vor.u32 %v518, %v514
      %v520 = vrot.slane %v519, 4
      %v522 = vshll.u32 %v257, 16
      %v524 = vrot.slane %v522, 5
      %v525 = vsel %vm285, %v520, %v524
      %v527 = vshrl.u32 %v258, 16
      %v529 = vrot.slane %v527, 4
      %v530 = vshll.u32 %v258, 16
      %v532 = vrot.slane %v530, 5
      %v533 = vor.u32 %v529, %v532
      %v534 = vrot.slane %v533, 4
      %v536 = vshll.u32 %v259, 16
      %v538 = vrot.slane %v536, 5
      %v539 = vsel %vm285, %v534, %v538
      %v540 = vshrl.u32 %v259, 16
      %v542 = vrot.slane %v540, 4
      %v543 = vor.u32 %v542, %v538
      %v544 = vrot.slane %v543, 4
      %v546 = vshll.u32 %v260, 16
      %v548 = vrot.slane %v546, 5
      %v549 = vsel %vm285, %v544, %v548
      %v551 = vshrl.u32 %v261, 16
      %v553 = vrot.slane %v551, 4
      %v554 = vshll.u32 %v261, 16
      %v556 = vrot.slane %v554, 5
      %v557 = vor.u32 %v553, %v556
      %v558 = vrot.slane %v557, 4
      %v560 = vshll.u32 %v262, 16
      %v562 = vrot.slane %v560, 5
      %v563 = vsel %vm285, %v558, %v562
      %v564 = vshrl.u32 %v262, 16
      %v566 = vrot.slane %v564, 4
      %v567 = vor.u32 %v566, %v562
      %v568 = vrot.slane %v567, 4
      %v570 = vshll.u32 %v263, 16
      %v572 = vrot.slane %v570, 5
      %v573 = vsel %vm285, %v568, %v572
      %v575 = vshrl.u32 %v264, 16
      %v577 = vrot.slane %v575, 4
      %v578 = vshll.u32 %v264, 16
      %v580 = vrot.slane %v578, 5
      %v581 = vor.u32 %v577, %v580
      %v582 = vrot.slane %v581, 4
      %v584 = vshll.u32 %v265, 16
      %v586 = vrot.slane %v584, 5
      %v587 = vsel %vm285, %v582, %v586
      %v588 = vshrl.u32 %v265, 16
      %v590 = vrot.slane %v588, 4
      %v591 = vor.u32 %v590, %v586
      %v592 = vrot.slane %v591, 4
      %v594 = vshll.u32 %v266, 16
      %v596 = vrot.slane %v594, 5
      %v597 = vsel %vm285, %v592, %v596
      %v599 = vshrl.u32 %v267, 16
      %v601 = vrot.slane %v599, 4
      %v602 = vshll.u32 %v267, 16
      %v604 = vrot.slane %v602, 5
      %v605 = vor.u32 %v601, %v604
      %v606 = vrot.slane %v605, 4
      %v608 = vshll.u32 %v268, 16
      %v610 = vrot.slane %v608, 5
      %v611 = vsel %vm285, %v606, %v610
      %v612 = vshrl.u32 %v268, 16
      %v614 = vrot.slane %v612, 4
      %v615 = vor.u32 %v614, %v610
      %v616 = vrot.slane %v615, 4
      %v618 = vshll.u32 %v269, 16
      %v620 = vrot.slane %v618, 5
      %v621 = vsel %vm285, %v616, %v620
      %v623 = vshrl.u32 %v270, 16
      %v625 = vrot.slane %v623, 4
      %v626 = vshll.u32 %v270, 16
      %v628 = vrot.slane %v626, 5
      %v629 = vor.u32 %v625, %v628
      %v630 = vrot.slane %v629, 4
      %v632 = vshll.u32 %v271, 16
      %v634 = vrot.slane %v632, 5
      %v635 = vsel %vm285, %v630, %v634
      %v636 = vshrl.u32 %v271, 16
      %v638 = vrot.slane %v636, 4
      %v639 = vor.u32 %v638, %v634
      %v640 = vrot.slane %v639, 4
      %v642 = vshll.u32 %v272, 16
      %v644 = vrot.slane %v642, 5
      %v645 = vsel %vm285, %v640, %v644
      %v647 = vshrl.u32 %v273, 16
      %v649 = vrot.slane %v647, 4
      %v650 = vshll.u32 %v273, 16
      %v652 = vrot.slane %v650, 5
      %v653 = vor.u32 %v649, %v652
      %v654 = vrot.slane %v653, 4
      %v656 = vshll.u32 %v274, 16
      %v658 = vrot.slane %v656, 5
      %v659 = vsel %vm285, %v654, %v658
      %v660 = vshrl.u32 %v274, 16
      %v662 = vrot.slane %v660, 4
      %v663 = vor.u32 %v662, %v658
      %v664 = vrot.slane %v663, 4
      %v666 = vshll.u32 %v275, 16
      %v668 = vrot.slane %v666, 5
      %v669 = vsel %vm285, %v664, %v668
      %s670 = scalar_lea.vmem %s1, 2
      %v671 = vld [vmem:[%s670] sm:$0x3]
      %v672 = vunpack.c.l.b16 %v299
      %v673 = vunpack.c.l.b16 %v309
      %v674 = vunpack.c.l.b16 %v323
      %v675 = vunpack.c.l.b16 %v333
      %v676 = vunpack.c.l.b16 %v347
      %v677 = vunpack.c.l.b16 %v357
      %v678 = vunpack.c.l.b16 %v371
      %v679 = vunpack.c.l.b16 %v381
      %v680 = vunpack.c.l.b16 %v395
      %v681 = vunpack.c.l.b16 %v405
      %v682 = vunpack.c.l.b16 %v419
      %v683 = vunpack.c.l.b16 %v429
      %v684 = vunpack.c.l.b16 %v443
      %v685 = vunpack.c.l.b16 %v453
      %v686 = vunpack.c.l.b16 %v467
      %v687 = vunpack.c.l.b16 %v477
      %v688 = vunpack.c.l.b16 %v491
      %v689 = vunpack.c.l.b16 %v501
      %v690 = vunpack.c.l.b16 %v515
      %v691 = vunpack.c.l.b16 %v525
      %v692 = vunpack.c.l.b16 %v539
      %v693 = vunpack.c.l.b16 %v549
      %v694 = vunpack.c.l.b16 %v563
      %v695 = vunpack.c.l.b16 %v573
      %v696 = vunpack.c.l.b16 %v587
      %v697 = vunpack.c.l.b16 %v597
      %v698 = vunpack.c.l.b16 %v611
      %v699 = vunpack.c.l.b16 %v621
      %v700 = vunpack.c.l.b16 %v635
      %v701 = vunpack.c.l.b16 %v645
      %v702 = vunpack.c.l.b16 %v659
      %v703 = vunpack.c.l.b16 %v669
      %v704 = vpack.c.b16 %v673, %v672
      %v705 = vpack.c.b16 %v675, %v674
      %v706 = vpack.c.b16 %v677, %v676
      %v707 = vpack.c.b16 %v679, %v678
      %v708 = vpack.c.b16 %v681, %v680
      %v709 = vpack.c.b16 %v683, %v682
      %v710 = vpack.c.b16 %v685, %v684
      %v711 = vpack.c.b16 %v687, %v686
      %v712 = vpack.c.b16 %v689, %v688
      %v713 = vpack.c.b16 %v691, %v690
      %v714 = vpack.c.b16 %v693, %v692
      %v715 = vpack.c.b16 %v695, %v694
      %v716 = vpack.c.b16 %v697, %v696
      %v717 = vpack.c.b16 %v699, %v698
      %v718 = vpack.c.b16 %v701, %v700
      %v719 = vpack.c.b16 %v703, %v702
      %vm720 = vcmask 31744
      %v722 = vsel %vm720, %v704, 0
      %v725 = vsel %vm720, %v705, 0
      %v728 = vsel %vm720, %v706, 0
      %v731 = vsel %vm720, %v707, 0
      %v734 = vsel %vm720, %v708, 0
      %v737 = vsel %vm720, %v709, 0
      %v740 = vsel %vm720, %v710, 0
      %v743 = vsel %vm720, %v711, 0
      %v746 = vsel %vm720, %v712, 0
      %v749 = vsel %vm720, %v713, 0
      %v752 = vsel %vm720, %v714, 0
      %v755 = vsel %vm720, %v715, 0
      %v758 = vsel %vm720, %v716, 0
      %v761 = vsel %vm720, %v717, 0
      %v764 = vsel %vm720, %v718, 0
      %v767 = vsel %vm720, %v719, 0
      %vm769 = vcmask 1041408
      %v771 = vsel %vm769, %v671, 0
      %773 = vmatprep.subr.bf16.mxu0 0
      %774 = vmatpush1.bf16.msra.mxu0 0
      %775 = vmatprep.subr.bf16.mxu0 0
      %776 = vmatpush1.bf16.msra.mxu0 0
      %777 = vmatprep.subr.bf16.mxu0 0
      %778 = vmatpush1.bf16.msra.mxu0 0
      %779 = vmatprep.subr.bf16.mxu0 0
      %780 = vmatpush1.bf16.msra.mxu0 0
      %781 = vmatprep.subr.bf16.mxu0 0
      %782 = vmatpush1.bf16.msra.mxu0 0
      %783 = vmatprep.subr.bf16.mxu0 0
      %784 = vmatpush1.bf16.msra.mxu0 0
      %785 = vmatprep.subr.bf16.mxu0 0
      %786 = vmatpush1.bf16.msra.mxu0 0
      %787 = vmatprep.subr.bf16.mxu0 0
      %788 = vmatpush1.bf16.msra.mxu0 %v771
      %789 = vmatprep.subr.bf16.mxu0 0
      %790 = vmatpush2.bf16.msra.mxu0 0
      %791 = vmatprep.subr.bf16.mxu0 0
      %792 = vmatpush2.bf16.msra.mxu0 0
      %793 = vmatprep.subr.bf16.mxu0 0
      %794 = vmatpush2.bf16.msra.mxu0 0
      %795 = vmatprep.subr.bf16.mxu0 0
      %796 = vmatpush2.bf16.msra.mxu0 0
      %797 = vmatprep.subr.bf16.mxu0 0
      %798 = vmatpush2.bf16.msra.mxu0 0
      %799 = vmatprep.subr.bf16.mxu0 0
      %800 = vmatpush2.bf16.msra.mxu0 0
      %801 = vmatprep.subr.bf16.mxu0 0
      %802 = vmatpush2.bf16.msra.mxu0 0
      %803 = vmatprep.subr.bf16.mxu0 0
      %804 = vmatpush2.bf16.msra.mxu0 0
      %805 = vmatprep.mubr.bf16.mxu0 0
      %806 = vmatmul.mubr.bf16.gmra.mxu0 %v722
      %v807 = vpop.f32.mrf.mxu0
      %v808 = vadd.f32 0.0, %v807
      %v809 = vpop.f32.mrf.mxu0
      %v810 = vpop.f32.mrf.mxu0
      %v811 = vadd.f32 0.0, %v810
      %v812 = vpop.f32.mrf.mxu0
      %813 = vmatprep.mubr.bf16.mxu0 0
      %814 = vmatmul.mubr.bf16.gmra.mxu0 %v725
      %v815 = vpop.f32.mrf.mxu0
      %v816 = vadd.f32 0.0, %v815
      %v817 = vpop.f32.mrf.mxu0
      %v818 = vpop.f32.mrf.mxu0
      %v819 = vadd.f32 0.0, %v818
      %v820 = vpop.f32.mrf.mxu0
      %821 = vmatprep.mubr.bf16.mxu0 0
      %822 = vmatmul.mubr.bf16.gmra.mxu0 %v728
      %v823 = vpop.f32.mrf.mxu0
      %v824 = vadd.f32 0.0, %v823
      %v825 = vpop.f32.mrf.mxu0
      %v826 = vpop.f32.mrf.mxu0
      %v827 = vadd.f32 0.0, %v826
      %v828 = vpop.f32.mrf.mxu0
      %829 = vmatprep.mubr.bf16.mxu0 0
      %830 = vmatmul.mubr.bf16.gmra.mxu0 %v731
      %v831 = vpop.f32.mrf.mxu0
      %v832 = vadd.f32 0.0, %v831
      %v833 = vpop.f32.mrf.mxu0
      %v834 = vpop.f32.mrf.mxu0
      %v835 = vadd.f32 0.0, %v834
      %v836 = vpop.f32.mrf.mxu0
      %837 = vmatprep.mubr.bf16.mxu0 0
      %838 = vmatmul.mubr.bf16.gmra.mxu0 %v734
      %v839 = vpop.f32.mrf.mxu0
      %v840 = vadd.f32 0.0, %v839
      %v841 = vpop.f32.mrf.mxu0
      %v842 = vpop.f32.mrf.mxu0
      %v843 = vadd.f32 0.0, %v842
      %v844 = vpop.f32.mrf.mxu0
      %845 = vmatprep.mubr.bf16.mxu0 0
      %846 = vmatmul.mubr.bf16.gmra.mxu0 %v737
      %v847 = vpop.f32.mrf.mxu0
      %v848 = vadd.f32 0.0, %v847
      %v849 = vpop.f32.mrf.mxu0
      %v850 = vpop.f32.mrf.mxu0
      %v851 = vadd.f32 0.0, %v850
      %v852 = vpop.f32.mrf.mxu0
      %853 = vmatprep.mubr.bf16.mxu0 0
      %854 = vmatmul.mubr.bf16.gmra.mxu0 %v740
      %v855 = vpop.f32.mrf.mxu0
      %v856 = vadd.f32 0.0, %v855
      %v857 = vpop.f32.mrf.mxu0
      %v858 = vpop.f32.mrf.mxu0
      %v859 = vadd.f32 0.0, %v858
      %v860 = vpop.f32.mrf.mxu0
      %861 = vmatprep.mubr.bf16.mxu0 0
      %862 = vmatmul.mubr.bf16.gmra.mxu0 %v743
      %v863 = vpop.f32.mrf.mxu0
      %v864 = vadd.f32 0.0, %v863
      %v865 = vpop.f32.mrf.mxu0
      %v866 = vpop.f32.mrf.mxu0
      %v867 = vadd.f32 0.0, %v866
      %v868 = vpop.f32.mrf.mxu0
      %869 = vmatprep.mubr.bf16.mxu0 0
      %870 = vmatmul.mubr.bf16.gmra.mxu0 %v746
      %v871 = vpop.f32.mrf.mxu0
      %v872 = vadd.f32 0.0, %v871
      %v873 = vpop.f32.mrf.mxu0
      %v874 = vpop.f32.mrf.mxu0
      %v875 = vadd.f32 0.0, %v874
      %v876 = vpop.f32.mrf.mxu0
      %877 = vmatprep.mubr.bf16.mxu0 0
      %878 = vmatmul.mubr.bf16.gmra.mxu0 %v749
      %v879 = vpop.f32.mrf.mxu0
      %v880 = vadd.f32 0.0, %v879
      %v881 = vpop.f32.mrf.mxu0
      %v882 = vpop.f32.mrf.mxu0
      %v883 = vadd.f32 0.0, %v882
      %v884 = vpop.f32.mrf.mxu0
      %885 = vmatprep.mubr.bf16.mxu0 0
      %886 = vmatmul.mubr.bf16.gmra.mxu0 %v752
      %v887 = vpop.f32.mrf.mxu0
      %v888 = vadd.f32 0.0, %v887
      %v889 = vpop.f32.mrf.mxu0
      %v890 = vpop.f32.mrf.mxu0
      %v891 = vadd.f32 0.0, %v890
      %v892 = vpop.f32.mrf.mxu0
      %893 = vmatprep.mubr.bf16.mxu0 0
      %894 = vmatmul.mubr.bf16.gmra.mxu0 %v755
      %v895 = vpop.f32.mrf.mxu0
      %v896 = vadd.f32 0.0, %v895
      %v897 = vpop.f32.mrf.mxu0
      %v898 = vpop.f32.mrf.mxu0
      %v899 = vadd.f32 0.0, %v898
      %v900 = vpop.f32.mrf.mxu0
      %901 = vmatprep.mubr.bf16.mxu0 0
      %902 = vmatmul.mubr.bf16.gmra.mxu0 %v758
      %v903 = vpop.f32.mrf.mxu0
      %v904 = vadd.f32 0.0, %v903
      %v905 = vpop.f32.mrf.mxu0
      %v906 = vpop.f32.mrf.mxu0
      %v907 = vadd.f32 0.0, %v906
      %v908 = vpop.f32.mrf.mxu0
      %909 = vmatprep.mubr.bf16.mxu0 0
      %910 = vmatmul.mubr.bf16.gmra.mxu0 %v761
      %v911 = vpop.f32.mrf.mxu0
      %v912 = vadd.f32 0.0, %v911
      %v913 = vpop.f32.mrf.mxu0
      %v914 = vpop.f32.mrf.mxu0
      %v915 = vadd.f32 0.0, %v914
      %v916 = vpop.f32.mrf.mxu0
      %917 = vmatprep.mubr.bf16.mxu0 0
      %918 = vmatmul.mubr.bf16.gmra.mxu0 %v764
      %v919 = vpop.f32.mrf.mxu0
      %v920 = vadd.f32 0.0, %v919
      %v921 = vpop.f32.mrf.mxu0
      %v922 = vpop.f32.mrf.mxu0
      %v923 = vadd.f32 0.0, %v922
      %v924 = vpop.f32.mrf.mxu0
      %925 = vmatprep.mubr.bf16.mxu0 0
      %926 = vmatmul.mubr.bf16.gmra.mxu0 %v767
      %v927 = vpop.f32.mrf.mxu0
      %v928 = vadd.f32 0.0, %v927
      %v929 = vpop.f32.mrf.mxu0
      %v930 = vpop.f32.mrf.mxu0
      %v931 = vadd.f32 0.0, %v930
      %v932 = vpop.f32.mrf.mxu0
      %933 = vdwg.mxu0
      %v966 = vunpack.c.l.b16 %v228
      %v967 = vunpack.c.l.b16 %v229
      %v968 = vunpack.c.l.b16 %v231
      %v969 = vunpack.c.l.b16 %v232
      %v970 = vunpack.c.l.b16 %v234
      %v971 = vunpack.c.l.b16 %v235
      %v972 = vunpack.c.l.b16 %v237
      %v973 = vunpack.c.l.b16 %v238
      %v974 = vunpack.c.l.b16 %v240
      %v975 = vunpack.c.l.b16 %v241
      %v976 = vunpack.c.l.b16 %v243
      %v977 = vunpack.c.l.b16 %v244
      %v978 = vunpack.c.l.b16 %v246
      %v979 = vunpack.c.l.b16 %v247
      %v980 = vunpack.c.l.b16 %v249
      %v981 = vunpack.c.l.b16 %v250
      %v982 = vunpack.c.l.b16 %v252
      %v983 = vunpack.c.l.b16 %v253
      %v984 = vunpack.c.l.b16 %v255
      %v985 = vunpack.c.l.b16 %v256
      %v986 = vunpack.c.l.b16 %v258
      %v987 = vunpack.c.l.b16 %v259
      %v988 = vunpack.c.l.b16 %v261
      %v989 = vunpack.c.l.b16 %v262
      %v990 = vunpack.c.l.b16 %v264
      %v991 = vunpack.c.l.b16 %v265
      %v992 = vunpack.c.l.b16 %v267
      %v993 = vunpack.c.l.b16 %v268
      %v994 = vunpack.c.l.b16 %v270
      %v995 = vunpack.c.l.b16 %v271
      %v996 = vunpack.c.l.b16 %v273
      %v997 = vunpack.c.l.b16 %v274
      %v998 = vpack.c.b16 %v967, %v966
      %v999 = vpack.c.b16 %v969, %v968
      %v1000 = vpack.c.b16 %v971, %v970
      %v1001 = vpack.c.b16 %v973, %v972
      %v1002 = vpack.c.b16 %v975, %v974
      %v1003 = vpack.c.b16 %v977, %v976
      %v1004 = vpack.c.b16 %v979, %v978
      %v1005 = vpack.c.b16 %v981, %v980
      %v1006 = vpack.c.b16 %v983, %v982
      %v1007 = vpack.c.b16 %v985, %v984
      %v1008 = vpack.c.b16 %v987, %v986
      %v1009 = vpack.c.b16 %v989, %v988
      %v1010 = vpack.c.b16 %v991, %v990
      %v1011 = vpack.c.b16 %v993, %v992
      %v1012 = vpack.c.b16 %v995, %v994
      %v1013 = vpack.c.b16 %v997, %v996
      %v1015 = vsel %vm720, %v998, 0
      %v1018 = vsel %vm720, %v999, 0
      %v1021 = vsel %vm720, %v1000, 0
      %v1024 = vsel %vm720, %v1001, 0
      %v1027 = vsel %vm720, %v1002, 0
      %v1030 = vsel %vm720, %v1003, 0
      %v1033 = vsel %vm720, %v1004, 0
      %v1036 = vsel %vm720, %v1005, 0
      %v1039 = vsel %vm720, %v1006, 0
      %v1042 = vsel %vm720, %v1007, 0
      %v1045 = vsel %vm720, %v1008, 0
      %v1048 = vsel %vm720, %v1009, 0
      %v1051 = vsel %vm720, %v1010, 0
      %v1054 = vsel %vm720, %v1011, 0
      %v1057 = vsel %vm720, %v1012, 0
      %v1060 = vsel %vm720, %v1013, 0
      %v1063 = vsel %vm769, %v282, 0
      %1065 = vmatprep.subr.bf16.mxu0 0
      %1066 = vmatpush1.bf16.msra.mxu0 0
      %1067 = vmatprep.subr.bf16.mxu0 0
      %1068 = vmatpush1.bf16.msra.mxu0 0
      %1069 = vmatprep.subr.bf16.mxu0 0
      %1070 = vmatpush1.bf16.msra.mxu0 0
      %1071 = vmatprep.subr.bf16.mxu0 0
      %1072 = vmatpush1.bf16.msra.mxu0 0
      %1073 = vmatprep.subr.bf16.mxu0 0
      %1074 = vmatpush1.bf16.msra.mxu0 0
      %1075 = vmatprep.subr.bf16.mxu0 0
      %1076 = vmatpush1.bf16.msra.mxu0 0
      %1077 = vmatprep.subr.bf16.mxu0 0
      %1078 = vmatpush1.bf16.msra.mxu0 0
      %1079 = vmatprep.subr.bf16.mxu0 0
      %1080 = vmatpush1.bf16.msra.mxu0 %v1063
      %1081 = vmatprep.subr.bf16.mxu0 0
      %1082 = vmatpush2.bf16.msra.mxu0 0
      %1083 = vmatprep.subr.bf16.mxu0 0
      %1084 = vmatpush2.bf16.msra.mxu0 0
      %1085 = vmatprep.subr.bf16.mxu0 0
      %1086 = vmatpush2.bf16.msra.mxu0 0
      %1087 = vmatprep.subr.bf16.mxu0 0
      %1088 = vmatpush2.bf16.msra.mxu0 0
      %1089 = vmatprep.subr.bf16.mxu0 0
      %1090 = vmatpush2.bf16.msra.mxu0 0
      %1091 = vmatprep.subr.bf16.mxu0 0
      %1092 = vmatpush2.bf16.msra.mxu0 0
      %1093 = vmatprep.subr.bf16.mxu0 0
      %1094 = vmatpush2.bf16.msra.mxu0 0
      %1095 = vmatprep.subr.bf16.mxu0 0
      %1096 = vmatpush2.bf16.msra.mxu0 0
      %1097 = vmatprep.mubr.bf16.mxu0 0
      %1098 = vmatmul.mubr.bf16.gmra.mxu0 %v1015
      %v1099 = vpop.f32.mrf.mxu0
      %v1100 = vadd.f32 %v808, %v1099
      %v1101 = vpop.f32.mrf.mxu0
      %v1102 = vpop.f32.mrf.mxu0
      %v1103 = vadd.f32 %v811, %v1102
      %v1104 = vpop.f32.mrf.mxu0
      %1105 = vmatprep.mubr.bf16.mxu0 0
      %1106 = vmatmul.mubr.bf16.gmra.mxu0 %v1018
      %v1107 = vpop.f32.mrf.mxu0
      %v1108 = vadd.f32 %v816, %v1107
      %v1109 = vpop.f32.mrf.mxu0
      %v1110 = vpop.f32.mrf.mxu0
      %v1111 = vadd.f32 %v819, %v1110
      %v1112 = vpop.f32.mrf.mxu0
      %1113 = vmatprep.mubr.bf16.mxu0 0
      %1114 = vmatmul.mubr.bf16.gmra.mxu0 %v1021
      %v1115 = vpop.f32.mrf.mxu0
      %v1116 = vadd.f32 %v824, %v1115
      %v1117 = vpop.f32.mrf.mxu0
      %v1118 = vpop.f32.mrf.mxu0
      %v1119 = vadd.f32 %v827, %v1118
      %v1120 = vpop.f32.mrf.mxu0
      %1121 = vmatprep.mubr.bf16.mxu0 0
      %1122 = vmatmul.mubr.bf16.gmra.mxu0 %v1024
      %v1123 = vpop.f32.mrf.mxu0
      %v1124 = vadd.f32 %v832, %v1123
      %v1125 = vpop.f32.mrf.mxu0
      %v1126 = vpop.f32.mrf.mxu0
      %v1127 = vadd.f32 %v835, %v1126
      %v1128 = vpop.f32.mrf.mxu0
      %1129 = vmatprep.mubr.bf16.mxu0 0
      %1130 = vmatmul.mubr.bf16.gmra.mxu0 %v1027
      %v1131 = vpop.f32.mrf.mxu0
      %v1132 = vadd.f32 %v840, %v1131
      %v1133 = vpop.f32.mrf.mxu0
      %v1134 = vpop.f32.mrf.mxu0
      %v1135 = vadd.f32 %v843, %v1134
      %v1136 = vpop.f32.mrf.mxu0
      %1137 = vmatprep.mubr.bf16.mxu0 0
      %1138 = vmatmul.mubr.bf16.gmra.mxu0 %v1030
      %v1139 = vpop.f32.mrf.mxu0
      %v1140 = vadd.f32 %v848, %v1139
      %v1141 = vpop.f32.mrf.mxu0
      %v1142 = vpop.f32.mrf.mxu0
      %v1143 = vadd.f32 %v851, %v1142
      %v1144 = vpop.f32.mrf.mxu0
      %1145 = vmatprep.mubr.bf16.mxu0 0
      %1146 = vmatmul.mubr.bf16.gmra.mxu0 %v1033
      %v1147 = vpop.f32.mrf.mxu0
      %v1148 = vadd.f32 %v856, %v1147
      %v1149 = vpop.f32.mrf.mxu0
      %v1150 = vpop.f32.mrf.mxu0
      %v1151 = vadd.f32 %v859, %v1150
      %v1152 = vpop.f32.mrf.mxu0
      %1153 = vmatprep.mubr.bf16.mxu0 0
      %1154 = vmatmul.mubr.bf16.gmra.mxu0 %v1036
      %v1155 = vpop.f32.mrf.mxu0
      %v1156 = vadd.f32 %v864, %v1155
      %v1157 = vpop.f32.mrf.mxu0
      %v1158 = vpop.f32.mrf.mxu0
      %v1159 = vadd.f32 %v867, %v1158
      %v1160 = vpop.f32.mrf.mxu0
      %1161 = vmatprep.mubr.bf16.mxu0 0
      %1162 = vmatmul.mubr.bf16.gmra.mxu0 %v1039
      %v1163 = vpop.f32.mrf.mxu0
      %v1164 = vadd.f32 %v872, %v1163
      %v1165 = vpop.f32.mrf.mxu0
      %v1166 = vpop.f32.mrf.mxu0
      %v1167 = vadd.f32 %v875, %v1166
      %v1168 = vpop.f32.mrf.mxu0
      %1169 = vmatprep.mubr.bf16.mxu0 0
      %1170 = vmatmul.mubr.bf16.gmra.mxu0 %v1042
      %v1171 = vpop.f32.mrf.mxu0
      %v1172 = vadd.f32 %v880, %v1171
      %v1173 = vpop.f32.mrf.mxu0
      %v1174 = vpop.f32.mrf.mxu0
      %v1175 = vadd.f32 %v883, %v1174
      %v1176 = vpop.f32.mrf.mxu0
      %1177 = vmatprep.mubr.bf16.mxu0 0
      %1178 = vmatmul.mubr.bf16.gmra.mxu0 %v1045
      %v1179 = vpop.f32.mrf.mxu0
      %v1180 = vadd.f32 %v888, %v1179
      %v1181 = vpop.f32.mrf.mxu0
      %v1182 = vpop.f32.mrf.mxu0
      %v1183 = vadd.f32 %v891, %v1182
      %v1184 = vpop.f32.mrf.mxu0
      %1185 = vmatprep.mubr.bf16.mxu0 0
      %1186 = vmatmul.mubr.bf16.gmra.mxu0 %v1048
      %v1187 = vpop.f32.mrf.mxu0
      %v1188 = vadd.f32 %v896, %v1187
      %v1189 = vpop.f32.mrf.mxu0
      %v1190 = vpop.f32.mrf.mxu0
      %v1191 = vadd.f32 %v899, %v1190
      %v1192 = vpop.f32.mrf.mxu0
      %1193 = vmatprep.mubr.bf16.mxu0 0
      %1194 = vmatmul.mubr.bf16.gmra.mxu0 %v1051
      %v1195 = vpop.f32.mrf.mxu0
      %v1196 = vadd.f32 %v904, %v1195
      %v1197 = vpop.f32.mrf.mxu0
      %v1198 = vpop.f32.mrf.mxu0
      %v1199 = vadd.f32 %v907, %v1198
      %v1200 = vpop.f32.mrf.mxu0
      %1201 = vmatprep.mubr.bf16.mxu0 0
      %1202 = vmatmul.mubr.bf16.gmra.mxu0 %v1054
      %v1203 = vpop.f32.mrf.mxu0
      %v1204 = vadd.f32 %v912, %v1203
      %v1205 = vpop.f32.mrf.mxu0
      %v1206 = vpop.f32.mrf.mxu0
      %v1207 = vadd.f32 %v915, %v1206
      %v1208 = vpop.f32.mrf.mxu0
      %1209 = vmatprep.mubr.bf16.mxu0 0
      %1210 = vmatmul.mubr.bf16.gmra.mxu0 %v1057
      %v1211 = vpop.f32.mrf.mxu0
      %v1212 = vadd.f32 %v920, %v1211
      %v1213 = vpop.f32.mrf.mxu0
      %v1214 = vpop.f32.mrf.mxu0
      %v1215 = vadd.f32 %v923, %v1214
      %v1216 = vpop.f32.mrf.mxu0
      %1217 = vmatprep.mubr.bf16.mxu0 0
      %1218 = vmatmul.mubr.bf16.gmra.mxu0 %v1060
      %v1219 = vpop.f32.mrf.mxu0
      %v1220 = vadd.f32 %v928, %v1219
      %v1221 = vpop.f32.mrf.mxu0
      %v1222 = vpop.f32.mrf.mxu0
      %v1223 = vadd.f32 %v931, %v1222
      %v1224 = vpop.f32.mrf.mxu0
      %1225 = vdwg.mxu0
      %vm1242 = vcmask 1042432
      %vm1243 = vcmask 1046532
      %vm1244 = vmor %vm1242, %vm1243
      %v1245 = vrot.slane %v228, 5
      %v1246 = vrot.slane %v1245, 4
      %v1247 = vrot.slane %v229, 5
      %v1248 = vsel %vm1244, %v1246, %v1247
      %v1249 = vrot.slane %v1247, 4
      %v1250 = vrot.slane %v230, 5
      %v1251 = vsel %vm1244, %v1249, %v1250
      %v1252 = vrot.slane %v231, 5
      %v1253 = vrot.slane %v1252, 4
      %v1254 = vrot.slane %v232, 5
      %v1255 = vsel %vm1244, %v1253, %v1254
      %v1256 = vrot.slane %v1254, 4
      %v1257 = vrot.slane %v233, 5
      %v1258 = vsel %vm1244, %v1256, %v1257
      %v1259 = vrot.slane %v234, 5
      %v1260 = vrot.slane %v1259, 4
      %v1261 = vrot.slane %v235, 5
      %v1262 = vsel %vm1244, %v1260, %v1261
      %v1263 = vrot.slane %v1261, 4
      %v1264 = vrot.slane %v236, 5
      %v1265 = vsel %vm1244, %v1263, %v1264
      %v1266 = vrot.slane %v237, 5
      %v1267 = vrot.slane %v1266, 4
      %v1268 = vrot.slane %v238, 5
      %v1269 = vsel %vm1244, %v1267, %v1268
      %v1270 = vrot.slane %v1268, 4
      %v1271 = vrot.slane %v239, 5
      %v1272 = vsel %vm1244, %v1270, %v1271
      %v1273 = vrot.slane %v240, 5
      %v1274 = vrot.slane %v1273, 4
      %v1275 = vrot.slane %v241, 5
      %v1276 = vsel %vm1244, %v1274, %v1275
      %v1277 = vrot.slane %v1275, 4
      %v1278 = vrot.slane %v242, 5
      %v1279 = vsel %vm1244, %v1277, %v1278
      %v1280 = vrot.slane %v243, 5
      %v1281 = vrot.slane %v1280, 4
      %v1282 = vrot.slane %v244, 5
      %v1283 = vsel %vm1244, %v1281, %v1282
      %v1284 = vrot.slane %v1282, 4
      %v1285 = vrot.slane %v245, 5
      %v1286 = vsel %vm1244, %v1284, %v1285
      %v1287 = vrot.slane %v246, 5
      %v1288 = vrot.slane %v1287, 4
      %v1289 = vrot.slane %v247, 5
      %v1290 = vsel %vm1244, %v1288, %v1289
      %v1291 = vrot.slane %v1289, 4
      %v1292 = vrot.slane %v248, 5
      %v1293 = vsel %vm1244, %v1291, %v1292
      %v1294 = vrot.slane %v249, 5
      %v1295 = vrot.slane %v1294, 4
      %v1296 = vrot.slane %v250, 5
      %v1297 = vsel %vm1244, %v1295, %v1296
      %v1298 = vrot.slane %v1296, 4
      %v1299 = vrot.slane %v251, 5
      %v1300 = vsel %vm1244, %v1298, %v1299
      %v1301 = vrot.slane %v252, 5
      %v1302 = vrot.slane %v1301, 4
      %v1303 = vrot.slane %v253, 5
      %v1304 = vsel %vm1244, %v1302, %v1303
      %v1305 = vrot.slane %v1303, 4
      %v1306 = vrot.slane %v254, 5
      %v1307 = vsel %vm1244, %v1305, %v1306
      %v1308 = vrot.slane %v255, 5
      %v1309 = vrot.slane %v1308, 4
      %v1310 = vrot.slane %v256, 5
      %v1311 = vsel %vm1244, %v1309, %v1310
      %v1312 = vrot.slane %v1310, 4
      %v1313 = vrot.slane %v257, 5
      %v1314 = vsel %vm1244, %v1312, %v1313
      %v1315 = vrot.slane %v258, 5
      %v1316 = vrot.slane %v1315, 4
      %v1317 = vrot.slane %v259, 5
      %v1318 = vsel %vm1244, %v1316, %v1317
      %v1319 = vrot.slane %v1317, 4
      %v1320 = vrot.slane %v260, 5
      %v1321 = vsel %vm1244, %v1319, %v1320
      %v1322 = vrot.slane %v261, 5
      %v1323 = vrot.slane %v1322, 4
      %v1324 = vrot.slane %v262, 5
      %v1325 = vsel %vm1244, %v1323, %v1324
      %v1326 = vrot.slane %v1324, 4
      %v1327 = vrot.slane %v263, 5
      %v1328 = vsel %vm1244, %v1326, %v1327
      %v1329 = vrot.slane %v264, 5
      %v1330 = vrot.slane %v1329, 4
      %v1331 = vrot.slane %v265, 5
      %v1332 = vsel %vm1244, %v1330, %v1331
      %v1333 = vrot.slane %v1331, 4
      %v1334 = vrot.slane %v266, 5
      %v1335 = vsel %vm1244, %v1333, %v1334
      %v1336 = vrot.slane %v267, 5
      %v1337 = vrot.slane %v1336, 4
      %v1338 = vrot.slane %v268, 5
      %v1339 = vsel %vm1244, %v1337, %v1338
      %v1340 = vrot.slane %v1338, 4
      %v1341 = vrot.slane %v269, 5
      %v1342 = vsel %vm1244, %v1340, %v1341
      %v1343 = vrot.slane %v270, 5
      %v1344 = vrot.slane %v1343, 4
      %v1345 = vrot.slane %v271, 5
      %v1346 = vsel %vm1244, %v1344, %v1345
      %v1347 = vrot.slane %v1345, 4
      %v1348 = vrot.slane %v272, 5
      %v1349 = vsel %vm1244, %v1347, %v1348
      %v1350 = vrot.slane %v273, 5
      %v1351 = vrot.slane %v1350, 4
      %v1352 = vrot.slane %v274, 5
      %v1353 = vsel %vm1244, %v1351, %v1352
      %v1354 = vrot.slane %v1352, 4
      %v1355 = vrot.slane %v275, 5
      %v1356 = vsel %vm1244, %v1354, %v1355
      %s1357 = scalar_lea.vmem %s1, 4
      %v1358 = vld [vmem:[%s1357] sm:$0x3]
      %v1359 = vunpack.c.l.b16 %v1248
      %v1360 = vunpack.c.l.b16 %v1251
      %v1361 = vunpack.c.l.b16 %v1255
      %v1362 = vunpack.c.l.b16 %v1258
      %v1363 = vunpack.c.l.b16 %v1262
      %v1364 = vunpack.c.l.b16 %v1265
      %v1365 = vunpack.c.l.b16 %v1269
      %v1366 = vunpack.c.l.b16 %v1272
      %v1367 = vunpack.c.l.b16 %v1276
      %v1368 = vunpack.c.l.b16 %v1279
      %v1369 = vunpack.c.l.b16 %v1283
      %v1370 = vunpack.c.l.b16 %v1286
      %v1371 = vunpack.c.l.b16 %v1290
      %v1372 = vunpack.c.l.b16 %v1293
      %v1373 = vunpack.c.l.b16 %v1297
      %v1374 = vunpack.c.l.b16 %v1300
      %v1375 = vunpack.c.l.b16 %v1304
      %v1376 = vunpack.c.l.b16 %v1307
      %v1377 = vunpack.c.l.b16 %v1311
      %v1378 = vunpack.c.l.b16 %v1314
      %v1379 = vunpack.c.l.b16 %v1318
      %v1380 = vunpack.c.l.b16 %v1321
      %v1381 = vunpack.c.l.b16 %v1325
      %v1382 = vunpack.c.l.b16 %v1328
      %v1383 = vunpack.c.l.b16 %v1332
      %v1384 = vunpack.c.l.b16 %v1335
      %v1385 = vunpack.c.l.b16 %v1339
      %v1386 = vunpack.c.l.b16 %v1342
      %v1387 = vunpack.c.l.b16 %v1346
      %v1388 = vunpack.c.l.b16 %v1349
      %v1389 = vunpack.c.l.b16 %v1353
      %v1390 = vunpack.c.l.b16 %v1356
      %v1391 = vpack.c.b16 %v1360, %v1359
      %v1392 = vpack.c.b16 %v1362, %v1361
      %v1393 = vpack.c.b16 %v1364, %v1363
      %v1394 = vpack.c.b16 %v1366, %v1365
      %v1395 = vpack.c.b16 %v1368, %v1367
      %v1396 = vpack.c.b16 %v1370, %v1369
      %v1397 = vpack.c.b16 %v1372, %v1371
      %v1398 = vpack.c.b16 %v1374, %v1373
      %v1399 = vpack.c.b16 %v1376, %v1375
      %v1400 = vpack.c.b16 %v1378, %v1377
      %v1401 = vpack.c.b16 %v1380, %v1379
      %v1402 = vpack.c.b16 %v1382, %v1381
      %v1403 = vpack.c.b16 %v1384, %v1383
      %v1404 = vpack.c.b16 %v1386, %v1385
      %v1405 = vpack.c.b16 %v1388, %v1387
      %v1406 = vpack.c.b16 %v1390, %v1389
      %v1408 = vsel %vm720, %v1391, 0
      %v1411 = vsel %vm720, %v1392, 0
      %v1414 = vsel %vm720, %v1393, 0
      %v1417 = vsel %vm720, %v1394, 0
      %v1420 = vsel %vm720, %v1395, 0
      %v1423 = vsel %vm720, %v1396, 0
      %v1426 = vsel %vm720, %v1397, 0
      %v1429 = vsel %vm720, %v1398, 0
      %v1432 = vsel %vm720, %v1399, 0
      %v1435 = vsel %vm720, %v1400, 0
      %v1438 = vsel %vm720, %v1401, 0
      %v1441 = vsel %vm720, %v1402, 0
      %v1444 = vsel %vm720, %v1403, 0
      %v1447 = vsel %vm720, %v1404, 0
      %v1450 = vsel %vm720, %v1405, 0
      %v1453 = vsel %vm720, %v1406, 0
      %v1456 = vsel %vm769, %v1358, 0
      %1458 = vmatprep.subr.bf16.mxu0 0
      %1459 = vmatpush1.bf16.msra.mxu0 0
      %1460 = vmatprep.subr.bf16.mxu0 0
      %1461 = vmatpush1.bf16.msra.mxu0 0
      %1462 = vmatprep.subr.bf16.mxu0 0
      %1463 = vmatpush1.bf16.msra.mxu0 0
      %1464 = vmatprep.subr.bf16.mxu0 0
      %1465 = vmatpush1.bf16.msra.mxu0 0
      %1466 = vmatprep.subr.bf16.mxu0 0
      %1467 = vmatpush1.bf16.msra.mxu0 0
      %1468 = vmatprep.subr.bf16.mxu0 0
      %1469 = vmatpush1.bf16.msra.mxu0 0
      %1470 = vmatprep.subr.bf16.mxu0 0
      %1471 = vmatpush1.bf16.msra.mxu0 0
      %1472 = vmatprep.subr.bf16.mxu0 0
      %1473 = vmatpush1.bf16.msra.mxu0 %v1456
      %1474 = vmatprep.subr.bf16.mxu0 0
      %1475 = vmatpush2.bf16.msra.mxu0 0
      %1476 = vmatprep.subr.bf16.mxu0 0
      %1477 = vmatpush2.bf16.msra.mxu0 0
      %1478 = vmatprep.subr.bf16.mxu0 0
      %1479 = vmatpush2.bf16.msra.mxu0 0
      %1480 = vmatprep.subr.bf16.mxu0 0
      %1481 = vmatpush2.bf16.msra.mxu0 0
      %1482 = vmatprep.subr.bf16.mxu0 0
      %1483 = vmatpush2.bf16.msra.mxu0 0
      %1484 = vmatprep.subr.bf16.mxu0 0
      %1485 = vmatpush2.bf16.msra.mxu0 0
      %1486 = vmatprep.subr.bf16.mxu0 0
      %1487 = vmatpush2.bf16.msra.mxu0 0
      %1488 = vmatprep.subr.bf16.mxu0 0
      %1489 = vmatpush2.bf16.msra.mxu0 0
      %1490 = vmatprep.mubr.bf16.mxu0 0
      %1491 = vmatmul.mubr.bf16.gmra.mxu0 %v1408
      %v1492 = vpop.f32.mrf.mxu0
      %v1493 = vadd.f32 0.0, %v1492
      %v1494 = vpop.f32.mrf.mxu0
      %v1495 = vpop.f32.mrf.mxu0
      %v1496 = vadd.f32 0.0, %v1495
      %v1497 = vpop.f32.mrf.mxu0
      %1498 = vmatprep.mubr.bf16.mxu0 0
      %1499 = vmatmul.mubr.bf16.gmra.mxu0 %v1411
      %v1500 = vpop.f32.mrf.mxu0
      %v1501 = vadd.f32 0.0, %v1500
      %v1502 = vpop.f32.mrf.mxu0
      %v1503 = vpop.f32.mrf.mxu0
      %v1504 = vadd.f32 0.0, %v1503
      %v1505 = vpop.f32.mrf.mxu0
      %1506 = vmatprep.mubr.bf16.mxu0 0
      %1507 = vmatmul.mubr.bf16.gmra.mxu0 %v1414
      %v1508 = vpop.f32.mrf.mxu0
      %v1509 = vadd.f32 0.0, %v1508
      %v1510 = vpop.f32.mrf.mxu0
      %v1511 = vpop.f32.mrf.mxu0
      %v1512 = vadd.f32 0.0, %v1511
      %v1513 = vpop.f32.mrf.mxu0
      %1514 = vmatprep.mubr.bf16.mxu0 0
      %1515 = vmatmul.mubr.bf16.gmra.mxu0 %v1417
      %v1516 = vpop.f32.mrf.mxu0
      %v1517 = vadd.f32 0.0, %v1516
      %v1518 = vpop.f32.mrf.mxu0
      %v1519 = vpop.f32.mrf.mxu0
      %v1520 = vadd.f32 0.0, %v1519
      %v1521 = vpop.f32.mrf.mxu0
      %1522 = vmatprep.mubr.bf16.mxu0 0
      %1523 = vmatmul.mubr.bf16.gmra.mxu0 %v1420
      %v1524 = vpop.f32.mrf.mxu0
      %v1525 = vadd.f32 0.0, %v1524
      %v1526 = vpop.f32.mrf.mxu0
      %v1527 = vpop.f32.mrf.mxu0
      %v1528 = vadd.f32 0.0, %v1527
      %v1529 = vpop.f32.mrf.mxu0
      %1530 = vmatprep.mubr.bf16.mxu0 0
      %1531 = vmatmul.mubr.bf16.gmra.mxu0 %v1423
      %v1532 = vpop.f32.mrf.mxu0
      %v1533 = vadd.f32 0.0, %v1532
      %v1534 = vpop.f32.mrf.mxu0
      %v1535 = vpop.f32.mrf.mxu0
      %v1536 = vadd.f32 0.0, %v1535
      %v1537 = vpop.f32.mrf.mxu0
      %1538 = vmatprep.mubr.bf16.mxu0 0
      %1539 = vmatmul.mubr.bf16.gmra.mxu0 %v1426
      %v1540 = vpop.f32.mrf.mxu0
      %v1541 = vadd.f32 0.0, %v1540
      %v1542 = vpop.f32.mrf.mxu0
      %v1543 = vpop.f32.mrf.mxu0
      %v1544 = vadd.f32 0.0, %v1543
      %v1545 = vpop.f32.mrf.mxu0
      %1546 = vmatprep.mubr.bf16.mxu0 0
      %1547 = vmatmul.mubr.bf16.gmra.mxu0 %v1429
      %v1548 = vpop.f32.mrf.mxu0
      %v1549 = vadd.f32 0.0, %v1548
      %v1550 = vpop.f32.mrf.mxu0
      %v1551 = vpop.f32.mrf.mxu0
      %v1552 = vadd.f32 0.0, %v1551
      %v1553 = vpop.f32.mrf.mxu0
      %1554 = vmatprep.mubr.bf16.mxu0 0
      %1555 = vmatmul.mubr.bf16.gmra.mxu0 %v1432
      %v1556 = vpop.f32.mrf.mxu0
      %v1557 = vadd.f32 0.0, %v1556
      %v1558 = vpop.f32.mrf.mxu0
      %v1559 = vpop.f32.mrf.mxu0
      %v1560 = vadd.f32 0.0, %v1559
      %v1561 = vpop.f32.mrf.mxu0
      %1562 = vmatprep.mubr.bf16.mxu0 0
      %1563 = vmatmul.mubr.bf16.gmra.mxu0 %v1435
      %v1564 = vpop.f32.mrf.mxu0
      %v1565 = vadd.f32 0.0, %v1564
      %v1566 = vpop.f32.mrf.mxu0
      %v1567 = vpop.f32.mrf.mxu0
      %v1568 = vadd.f32 0.0, %v1567
      %v1569 = vpop.f32.mrf.mxu0
      %1570 = vmatprep.mubr.bf16.mxu0 0
      %1571 = vmatmul.mubr.bf16.gmra.mxu0 %v1438
      %v1572 = vpop.f32.mrf.mxu0
      %v1573 = vadd.f32 0.0, %v1572
      %v1574 = vpop.f32.mrf.mxu0
      %v1575 = vpop.f32.mrf.mxu0
      %v1576 = vadd.f32 0.0, %v1575
      %v1577 = vpop.f32.mrf.mxu0
      %1578 = vmatprep.mubr.bf16.mxu0 0
      %1579 = vmatmul.mubr.bf16.gmra.mxu0 %v1441
      %v1580 = vpop.f32.mrf.mxu0
      %v1581 = vadd.f32 0.0, %v1580
      %v1582 = vpop.f32.mrf.mxu0
      %v1583 = vpop.f32.mrf.mxu0
      %v1584 = vadd.f32 0.0, %v1583
      %v1585 = vpop.f32.mrf.mxu0
      %1586 = vmatprep.mubr.bf16.mxu0 0
      %1587 = vmatmul.mubr.bf16.gmra.mxu0 %v1444
      %v1588 = vpop.f32.mrf.mxu0
      %v1589 = vadd.f32 0.0, %v1588
      %v1590 = vpop.f32.mrf.mxu0
      %v1591 = vpop.f32.mrf.mxu0
      %v1592 = vadd.f32 0.0, %v1591
      %v1593 = vpop.f32.mrf.mxu0
      %1594 = vmatprep.mubr.bf16.mxu0 0
      %1595 = vmatmul.mubr.bf16.gmra.mxu0 %v1447
      %v1596 = vpop.f32.mrf.mxu0
      %v1597 = vadd.f32 0.0, %v1596
      %v1598 = vpop.f32.mrf.mxu0
      %v1599 = vpop.f32.mrf.mxu0
      %v1600 = vadd.f32 0.0, %v1599
      %v1601 = vpop.f32.mrf.mxu0
      %1602 = vmatprep.mubr.bf16.mxu0 0
      %1603 = vmatmul.mubr.bf16.gmra.mxu0 %v1450
      %v1604 = vpop.f32.mrf.mxu0
      %v1605 = vadd.f32 0.0, %v1604
      %v1606 = vpop.f32.mrf.mxu0
      %v1607 = vpop.f32.mrf.mxu0
      %v1608 = vadd.f32 0.0, %v1607
      %v1609 = vpop.f32.mrf.mxu0
      %1610 = vmatprep.mubr.bf16.mxu0 0
      %1611 = vmatmul.mubr.bf16.gmra.mxu0 %v1453
      %v1612 = vpop.f32.mrf.mxu0
      %v1613 = vadd.f32 0.0, %v1612
      %v1614 = vpop.f32.mrf.mxu0
      %v1615 = vpop.f32.mrf.mxu0
      %v1616 = vadd.f32 0.0, %v1615
      %v1617 = vpop.f32.mrf.mxu0
      %1618 = vdwg.mxu0
      %v1619 = vadd.f32 %v1100, %v1493
      %v1620 = vadd.f32 %v1103, %v1496
      %v1621 = vadd.f32 %v1108, %v1501
      %v1622 = vadd.f32 %v1111, %v1504
      %v1623 = vadd.f32 %v1116, %v1509
      %v1624 = vadd.f32 %v1119, %v1512
      %v1625 = vadd.f32 %v1124, %v1517
      %v1626 = vadd.f32 %v1127, %v1520
      %v1627 = vadd.f32 %v1132, %v1525
      %v1628 = vadd.f32 %v1135, %v1528
      %v1629 = vadd.f32 %v1140, %v1533
      %v1630 = vadd.f32 %v1143, %v1536
      %v1631 = vadd.f32 %v1148, %v1541
      %v1632 = vadd.f32 %v1151, %v1544
      %v1633 = vadd.f32 %v1156, %v1549
      %v1634 = vadd.f32 %v1159, %v1552
      %v1635 = vadd.f32 %v1164, %v1557
      %v1636 = vadd.f32 %v1167, %v1560
      %v1637 = vadd.f32 %v1172, %v1565
      %v1638 = vadd.f32 %v1175, %v1568
      %v1639 = vadd.f32 %v1180, %v1573
      %v1640 = vadd.f32 %v1183, %v1576
      %v1641 = vadd.f32 %v1188, %v1581
      %v1642 = vadd.f32 %v1191, %v1584
      %v1643 = vadd.f32 %v1196, %v1589
      %v1644 = vadd.f32 %v1199, %v1592
      %v1645 = vadd.f32 %v1204, %v1597
      %v1646 = vadd.f32 %v1207, %v1600
      %v1647 = vadd.f32 %v1212, %v1605
      %v1648 = vadd.f32 %v1215, %v1608
      %v1649 = vadd.f32 %v1220, %v1613
      %v1650 = vadd.f32 %v1223, %v1616
      %s1651 = scalar_lea.vmem %s1, 6
      %v1652 = vld [vmem:[%s1651] sm:$0x3]
      %v1655 = vunpack.c.l.b16 %v276
      %v1656 = vunpack.c.l.b16 %v277
      %v1657 = vpack.c.b16 %v1656, %v1655
      %v1659 = vsel %vm720, %v1657, 0
      %v1662 = vsel %vm769, %v1652, 0
      %1664 = vmatprep.subr.bf16.mxu0 0
      %1665 = vmatpush1.bf16.msra.mxu0 0
      %1666 = vmatprep.subr.bf16.mxu0 0
      %1667 = vmatpush1.bf16.msra.mxu0 0
      %1668 = vmatprep.subr.bf16.mxu0 0
      %1669 = vmatpush1.bf16.msra.mxu0 0
      %1670 = vmatprep.subr.bf16.mxu0 0
      %1671 = vmatpush1.bf16.msra.mxu0 0
      %1672 = vmatprep.subr.bf16.mxu0 0
      %1673 = vmatpush1.bf16.msra.mxu0 0
      %1674 = vmatprep.subr.bf16.mxu0 0
      %1675 = vmatpush1.bf16.msra.mxu0 0
      %1676 = vmatprep.subr.bf16.mxu0 0
      %1677 = vmatpush1.bf16.msra.mxu0 0
      %1678 = vmatprep.subr.bf16.mxu0 0
      %1679 = vmatpush1.bf16.msra.mxu0 %v1662
      %1680 = vmatprep.subr.bf16.mxu0 0
      %1681 = vmatpush2.bf16.msra.mxu0 0
      %1682 = vmatprep.subr.bf16.mxu0 0
      %1683 = vmatpush2.bf16.msra.mxu0 0
      %1684 = vmatprep.subr.bf16.mxu0 0
      %1685 = vmatpush2.bf16.msra.mxu0 0
      %1686 = vmatprep.subr.bf16.mxu0 0
      %1687 = vmatpush2.bf16.msra.mxu0 0
      %1688 = vmatprep.subr.bf16.mxu0 0
      %1689 = vmatpush2.bf16.msra.mxu0 0
      %1690 = vmatprep.subr.bf16.mxu0 0
      %1691 = vmatpush2.bf16.msra.mxu0 0
      %1692 = vmatprep.subr.bf16.mxu0 0
      %1693 = vmatpush2.bf16.msra.mxu0 0
      %1694 = vmatprep.subr.bf16.mxu0 0
      %1695 = vmatpush2.bf16.msra.mxu0 0
      %1696 = vmatprep.mubr.bf16.mxu0 0
      %1697 = vmatmul.mubr.bf16.gmra.mxu0 %v1018
      %v1698 = vpop.f32.mrf.mxu0
      %v1699 = vadd.f32 0.0, %v1698
      %v1700 = vpop.f32.mrf.mxu0
      %v1701 = vpop.f32.mrf.mxu0
      %v1702 = vadd.f32 0.0, %v1701
      %v1703 = vpop.f32.mrf.mxu0
      %1704 = vmatprep.mubr.bf16.mxu0 0
      %1705 = vmatmul.mubr.bf16.gmra.mxu0 %v1021
      %v1706 = vpop.f32.mrf.mxu0
      %v1707 = vadd.f32 0.0, %v1706
      %v1708 = vpop.f32.mrf.mxu0
      %v1709 = vpop.f32.mrf.mxu0
      %v1710 = vadd.f32 0.0, %v1709
      %v1711 = vpop.f32.mrf.mxu0
      %1712 = vmatprep.mubr.bf16.mxu0 0
      %1713 = vmatmul.mubr.bf16.gmra.mxu0 %v1024
      %v1714 = vpop.f32.mrf.mxu0
      %v1715 = vadd.f32 0.0, %v1714
      %v1716 = vpop.f32.mrf.mxu0
      %v1717 = vpop.f32.mrf.mxu0
      %v1718 = vadd.f32 0.0, %v1717
      %v1719 = vpop.f32.mrf.mxu0
      %1720 = vmatprep.mubr.bf16.mxu0 0
      %1721 = vmatmul.mubr.bf16.gmra.mxu0 %v1027
      %v1722 = vpop.f32.mrf.mxu0
      %v1723 = vadd.f32 0.0, %v1722
      %v1724 = vpop.f32.mrf.mxu0
      %v1725 = vpop.f32.mrf.mxu0
      %v1726 = vadd.f32 0.0, %v1725
      %v1727 = vpop.f32.mrf.mxu0
      %1728 = vmatprep.mubr.bf16.mxu0 0
      %1729 = vmatmul.mubr.bf16.gmra.mxu0 %v1030
      %v1730 = vpop.f32.mrf.mxu0
      %v1731 = vadd.f32 0.0, %v1730
      %v1732 = vpop.f32.mrf.mxu0
      %v1733 = vpop.f32.mrf.mxu0
      %v1734 = vadd.f32 0.0, %v1733
      %v1735 = vpop.f32.mrf.mxu0
      %1736 = vmatprep.mubr.bf16.mxu0 0
      %1737 = vmatmul.mubr.bf16.gmra.mxu0 %v1033
      %v1738 = vpop.f32.mrf.mxu0
      %v1739 = vadd.f32 0.0, %v1738
      %v1740 = vpop.f32.mrf.mxu0
      %v1741 = vpop.f32.mrf.mxu0
      %v1742 = vadd.f32 0.0, %v1741
      %v1743 = vpop.f32.mrf.mxu0
      %1744 = vmatprep.mubr.bf16.mxu0 0
      %1745 = vmatmul.mubr.bf16.gmra.mxu0 %v1036
      %v1746 = vpop.f32.mrf.mxu0
      %v1747 = vadd.f32 0.0, %v1746
      %v1748 = vpop.f32.mrf.mxu0
      %v1749 = vpop.f32.mrf.mxu0
      %v1750 = vadd.f32 0.0, %v1749
      %v1751 = vpop.f32.mrf.mxu0
      %1752 = vmatprep.mubr.bf16.mxu0 0
      %1753 = vmatmul.mubr.bf16.gmra.mxu0 %v1039
      %v1754 = vpop.f32.mrf.mxu0
      %v1755 = vadd.f32 0.0, %v1754
      %v1756 = vpop.f32.mrf.mxu0
      %v1757 = vpop.f32.mrf.mxu0
      %v1758 = vadd.f32 0.0, %v1757
      %v1759 = vpop.f32.mrf.mxu0
      %1760 = vmatprep.mubr.bf16.mxu0 0
      %1761 = vmatmul.mubr.bf16.gmra.mxu0 %v1042
      %v1762 = vpop.f32.mrf.mxu0
      %v1763 = vadd.f32 0.0, %v1762
      %v1764 = vpop.f32.mrf.mxu0
      %v1765 = vpop.f32.mrf.mxu0
      %v1766 = vadd.f32 0.0, %v1765
      %v1767 = vpop.f32.mrf.mxu0
      %1768 = vmatprep.mubr.bf16.mxu0 0
      %1769 = vmatmul.mubr.bf16.gmra.mxu0 %v1045
      %v1770 = vpop.f32.mrf.mxu0
      %v1771 = vadd.f32 0.0, %v1770
      %v1772 = vpop.f32.mrf.mxu0
      %v1773 = vpop.f32.mrf.mxu0
      %v1774 = vadd.f32 0.0, %v1773
      %v1775 = vpop.f32.mrf.mxu0
      %1776 = vmatprep.mubr.bf16.mxu0 0
      %1777 = vmatmul.mubr.bf16.gmra.mxu0 %v1048
      %v1778 = vpop.f32.mrf.mxu0
      %v1779 = vadd.f32 0.0, %v1778
      %v1780 = vpop.f32.mrf.mxu0
      %v1781 = vpop.f32.mrf.mxu0
      %v1782 = vadd.f32 0.0, %v1781
      %v1783 = vpop.f32.mrf.mxu0
      %1784 = vmatprep.mubr.bf16.mxu0 0
      %1785 = vmatmul.mubr.bf16.gmra.mxu0 %v1051
      %v1786 = vpop.f32.mrf.mxu0
      %v1787 = vadd.f32 0.0, %v1786
      %v1788 = vpop.f32.mrf.mxu0
      %v1789 = vpop.f32.mrf.mxu0
      %v1790 = vadd.f32 0.0, %v1789
      %v1791 = vpop.f32.mrf.mxu0
      %1792 = vmatprep.mubr.bf16.mxu0 0
      %1793 = vmatmul.mubr.bf16.gmra.mxu0 %v1054
      %v1794 = vpop.f32.mrf.mxu0
      %v1795 = vadd.f32 0.0, %v1794
      %v1796 = vpop.f32.mrf.mxu0
      %v1797 = vpop.f32.mrf.mxu0
      %v1798 = vadd.f32 0.0, %v1797
      %v1799 = vpop.f32.mrf.mxu0
      %1800 = vmatprep.mubr.bf16.mxu0 0
      %1801 = vmatmul.mubr.bf16.gmra.mxu0 %v1057
      %v1802 = vpop.f32.mrf.mxu0
      %v1803 = vadd.f32 0.0, %v1802
      %v1804 = vpop.f32.mrf.mxu0
      %v1805 = vpop.f32.mrf.mxu0
      %v1806 = vadd.f32 0.0, %v1805
      %v1807 = vpop.f32.mrf.mxu0
      %1808 = vmatprep.mubr.bf16.mxu0 0
      %1809 = vmatmul.mubr.bf16.gmra.mxu0 %v1060
      %v1810 = vpop.f32.mrf.mxu0
      %v1811 = vadd.f32 0.0, %v1810
      %v1812 = vpop.f32.mrf.mxu0
      %v1813 = vpop.f32.mrf.mxu0
      %v1814 = vadd.f32 0.0, %v1813
      %v1815 = vpop.f32.mrf.mxu0
      %1816 = vmatprep.mubr.bf16.mxu0 0
      %1817 = vmatmul.mubr.bf16.gmra.mxu0 %v1659
      %v1818 = vpop.f32.mrf.mxu0
      %v1819 = vadd.f32 0.0, %v1818
      %v1820 = vpop.f32.mrf.mxu0
      %v1821 = vpop.f32.mrf.mxu0
      %v1822 = vadd.f32 0.0, %v1821
      %v1823 = vpop.f32.mrf.mxu0
      %1824 = vdwg.mxu0
      %v1825 = vadd.f32 %v1619, %v1699
      %v1826 = vadd.f32 %v1620, %v1702
      %v1827 = vadd.f32 %v1621, %v1707
      %v1828 = vadd.f32 %v1622, %v1710
      %v1829 = vadd.f32 %v1623, %v1715
      %v1830 = vadd.f32 %v1624, %v1718
      %v1831 = vadd.f32 %v1625, %v1723
      %v1832 = vadd.f32 %v1626, %v1726
      %v1833 = vadd.f32 %v1627, %v1731
      %v1834 = vadd.f32 %v1628, %v1734
      %v1835 = vadd.f32 %v1629, %v1739
      %v1836 = vadd.f32 %v1630, %v1742
      %v1837 = vadd.f32 %v1631, %v1747
      %v1838 = vadd.f32 %v1632, %v1750
      %v1839 = vadd.f32 %v1633, %v1755
      %v1840 = vadd.f32 %v1634, %v1758
      %v1841 = vadd.f32 %v1635, %v1763
      %v1842 = vadd.f32 %v1636, %v1766
      %v1843 = vadd.f32 %v1637, %v1771
      %v1844 = vadd.f32 %v1638, %v1774
      %v1845 = vadd.f32 %v1639, %v1779
      %v1846 = vadd.f32 %v1640, %v1782
      %v1847 = vadd.f32 %v1641, %v1787
      %v1848 = vadd.f32 %v1642, %v1790
      %v1849 = vadd.f32 %v1643, %v1795
      %v1850 = vadd.f32 %v1644, %v1798
      %v1851 = vadd.f32 %v1645, %v1803
      %v1852 = vadd.f32 %v1646, %v1806
      %v1853 = vadd.f32 %v1647, %v1811
      %v1854 = vadd.f32 %v1648, %v1814
      %v1855 = vadd.f32 %v1649, %v1819
      %v1856 = vadd.f32 %v1650, %v1822
      %v1858 = vshrl.u32 %v276, 16
      %v1860 = vrot.slane %v1858, 4
      %v1861 = vshll.u32 %v276, 16
      %v1863 = vrot.slane %v1861, 5
      %v1864 = vor.u32 %v1860, %v1863
      %v1865 = vrot.slane %v1864, 4
      %v1867 = vshll.u32 %v277, 16
      %v1869 = vrot.slane %v1867, 5
      %v1870 = vsel %vm285, %v1865, %v1869
      %v1871 = vshrl.u32 %v277, 16
      %v1873 = vrot.slane %v1871, 4
      %v1874 = vor.u32 %v1873, %v1869
      %v1875 = vrot.slane %v1874, 4
      %v1877 = vshll.u32 %v278, 16
      %v1879 = vrot.slane %v1877, 5
      %v1880 = vsel %vm285, %v1875, %v1879
      %s1881 = scalar_lea.vmem %s1, 8
      %v1882 = vld [vmem:[%s1881] sm:$0x3]
      %v1883 = vunpack.c.l.b16 %v1870
      %v1884 = vunpack.c.l.b16 %v1880
      %v1885 = vpack.c.b16 %v1884, %v1883
      %v1887 = vsel %vm720, %v1885, 0
      %v1890 = vsel %vm769, %v1882, 0
      %1892 = vmatprep.subr.bf16.mxu0 0
      %1893 = vmatpush1.bf16.msra.mxu0 0
      %1894 = vmatprep.subr.bf16.mxu0 0
      %1895 = vmatpush1.bf16.msra.mxu0 0
      %1896 = vmatprep.subr.bf16.mxu0 0
      %1897 = vmatpush1.bf16.msra.mxu0 0
      %1898 = vmatprep.subr.bf16.mxu0 0
      %1899 = vmatpush1.bf16.msra.mxu0 0
      %1900 = vmatprep.subr.bf16.mxu0 0
      %1901 = vmatpush1.bf16.msra.mxu0 0
      %1902 = vmatprep.subr.bf16.mxu0 0
      %1903 = vmatpush1.bf16.msra.mxu0 0
      %1904 = vmatprep.subr.bf16.mxu0 0
      %1905 = vmatpush1.bf16.msra.mxu0 0
      %1906 = vmatprep.subr.bf16.mxu0 0
      %1907 = vmatpush1.bf16.msra.mxu0 %v1890
      %1908 = vmatprep.subr.bf16.mxu0 0
      %1909 = vmatpush2.bf16.msra.mxu0 0
      %1910 = vmatprep.subr.bf16.mxu0 0
      %1911 = vmatpush2.bf16.msra.mxu0 0
      %1912 = vmatprep.subr.bf16.mxu0 0
      %1913 = vmatpush2.bf16.msra.mxu0 0
      %1914 = vmatprep.subr.bf16.mxu0 0
      %1915 = vmatpush2.bf16.msra.mxu0 0
      %1916 = vmatprep.subr.bf16.mxu0 0
      %1917 = vmatpush2.bf16.msra.mxu0 0
      %1918 = vmatprep.subr.bf16.mxu0 0
      %1919 = vmatpush2.bf16.msra.mxu0 0
      %1920 = vmatprep.subr.bf16.mxu0 0
      %1921 = vmatpush2.bf16.msra.mxu0 0
      %1922 = vmatprep.subr.bf16.mxu0 0
      %1923 = vmatpush2.bf16.msra.mxu0 0
      %1924 = vmatprep.mubr.bf16.mxu0 0
      %1925 = vmatmul.mubr.bf16.gmra.mxu0 %v725
      %v1926 = vpop.f32.mrf.mxu0
      %v1927 = vadd.f32 0.0, %v1926
      %v1928 = vpop.f32.mrf.mxu0
      %v1929 = vpop.f32.mrf.mxu0
      %v1930 = vadd.f32 0.0, %v1929
      %v1931 = vpop.f32.mrf.mxu0
      %1932 = vmatprep.mubr.bf16.mxu0 0
      %1933 = vmatmul.mubr.bf16.gmra.mxu0 %v728
      %v1934 = vpop.f32.mrf.mxu0
      %v1935 = vadd.f32 0.0, %v1934
      %v1936 = vpop.f32.mrf.mxu0
      %v1937 = vpop.f32.mrf.mxu0
      %v1938 = vadd.f32 0.0, %v1937
      %v1939 = vpop.f32.mrf.mxu0
      %1940 = vmatprep.mubr.bf16.mxu0 0
      %1941 = vmatmul.mubr.bf16.gmra.mxu0 %v731
      %v1942 = vpop.f32.mrf.mxu0
      %v1943 = vadd.f32 0.0, %v1942
      %v1944 = vpop.f32.mrf.mxu0
      %v1945 = vpop.f32.mrf.mxu0
      %v1946 = vadd.f32 0.0, %v1945
      %v1947 = vpop.f32.mrf.mxu0
      %1948 = vmatprep.mubr.bf16.mxu0 0
      %1949 = vmatmul.mubr.bf16.gmra.mxu0 %v734
      %v1950 = vpop.f32.mrf.mxu0
      %v1951 = vadd.f32 0.0, %v1950
      %v1952 = vpop.f32.mrf.mxu0
      %v1953 = vpop.f32.mrf.mxu0
      %v1954 = vadd.f32 0.0, %v1953
      %v1955 = vpop.f32.mrf.mxu0
      %1956 = vmatprep.mubr.bf16.mxu0 0
      %1957 = vmatmul.mubr.bf16.gmra.mxu0 %v737
      %v1958 = vpop.f32.mrf.mxu0
      %v1959 = vadd.f32 0.0, %v1958
      %v1960 = vpop.f32.mrf.mxu0
      %v1961 = vpop.f32.mrf.mxu0
      %v1962 = vadd.f32 0.0, %v1961
      %v1963 = vpop.f32.mrf.mxu0
      %1964 = vmatprep.mubr.bf16.mxu0 0
      %1965 = vmatmul.mubr.bf16.gmra.mxu0 %v740
      %v1966 = vpop.f32.mrf.mxu0
      %v1967 = vadd.f32 0.0, %v1966
      %v1968 = vpop.f32.mrf.mxu0
      %v1969 = vpop.f32.mrf.mxu0
      %v1970 = vadd.f32 0.0, %v1969
      %v1971 = vpop.f32.mrf.mxu0
      %1972 = vmatprep.mubr.bf16.mxu0 0
      %1973 = vmatmul.mubr.bf16.gmra.mxu0 %v743
      %v1974 = vpop.f32.mrf.mxu0
      %v1975 = vadd.f32 0.0, %v1974
      %v1976 = vpop.f32.mrf.mxu0
      %v1977 = vpop.f32.mrf.mxu0
      %v1978 = vadd.f32 0.0, %v1977
      %v1979 = vpop.f32.mrf.mxu0
      %1980 = vmatprep.mubr.bf16.mxu0 0
      %1981 = vmatmul.mubr.bf16.gmra.mxu0 %v746
      %v1982 = vpop.f32.mrf.mxu0
      %v1983 = vadd.f32 0.0, %v1982
      %v1984 = vpop.f32.mrf.mxu0
      %v1985 = vpop.f32.mrf.mxu0
      %v1986 = vadd.f32 0.0, %v1985
      %v1987 = vpop.f32.mrf.mxu0
      %1988 = vmatprep.mubr.bf16.mxu0 0
      %1989 = vmatmul.mubr.bf16.gmra.mxu0 %v749
      %v1990 = vpop.f32.mrf.mxu0
      %v1991 = vadd.f32 0.0, %v1990
      %v1992 = vpop.f32.mrf.mxu0
      %v1993 = vpop.f32.mrf.mxu0
      %v1994 = vadd.f32 0.0, %v1993
      %v1995 = vpop.f32.mrf.mxu0
      %1996 = vmatprep.mubr.bf16.mxu0 0
      %1997 = vmatmul.mubr.bf16.gmra.mxu0 %v752
      %v1998 = vpop.f32.mrf.mxu0
      %v1999 = vadd.f32 0.0, %v1998
      %v2000 = vpop.f32.mrf.mxu0
      %v2001 = vpop.f32.mrf.mxu0
      %v2002 = vadd.f32 0.0, %v2001
      %v2003 = vpop.f32.mrf.mxu0
      %2004 = vmatprep.mubr.bf16.mxu0 0
      %2005 = vmatmul.mubr.bf16.gmra.mxu0 %v755
      %v2006 = vpop.f32.mrf.mxu0
      %v2007 = vadd.f32 0.0, %v2006
      %v2008 = vpop.f32.mrf.mxu0
      %v2009 = vpop.f32.mrf.mxu0
      %v2010 = vadd.f32 0.0, %v2009
      %v2011 = vpop.f32.mrf.mxu0
      %2012 = vmatprep.mubr.bf16.mxu0 0
      %2013 = vmatmul.mubr.bf16.gmra.mxu0 %v758
      %v2014 = vpop.f32.mrf.mxu0
      %v2015 = vadd.f32 0.0, %v2014
      %v2016 = vpop.f32.mrf.mxu0
      %v2017 = vpop.f32.mrf.mxu0
      %v2018 = vadd.f32 0.0, %v2017
      %v2019 = vpop.f32.mrf.mxu0
      %2020 = vmatprep.mubr.bf16.mxu0 0
      %2021 = vmatmul.mubr.bf16.gmra.mxu0 %v761
      %v2022 = vpop.f32.mrf.mxu0
      %v2023 = vadd.f32 0.0, %v2022
      %v2024 = vpop.f32.mrf.mxu0
      %v2025 = vpop.f32.mrf.mxu0
      %v2026 = vadd.f32 0.0, %v2025
      %v2027 = vpop.f32.mrf.mxu0
      %2028 = vmatprep.mubr.bf16.mxu0 0
      %2029 = vmatmul.mubr.bf16.gmra.mxu0 %v764
      %v2030 = vpop.f32.mrf.mxu0
      %v2031 = vadd.f32 0.0, %v2030
      %v2032 = vpop.f32.mrf.mxu0
      %v2033 = vpop.f32.mrf.mxu0
      %v2034 = vadd.f32 0.0, %v2033
      %v2035 = vpop.f32.mrf.mxu0
      %2036 = vmatprep.mubr.bf16.mxu0 0
      %2037 = vmatmul.mubr.bf16.gmra.mxu0 %v767
      %v2038 = vpop.f32.mrf.mxu0
      %v2039 = vadd.f32 0.0, %v2038
      %v2040 = vpop.f32.mrf.mxu0
      %v2041 = vpop.f32.mrf.mxu0
      %v2042 = vadd.f32 0.0, %v2041
      %v2043 = vpop.f32.mrf.mxu0
      %2044 = vmatprep.mubr.bf16.mxu0 0
      %2045 = vmatmul.mubr.bf16.gmra.mxu0 %v1887
      %v2046 = vpop.f32.mrf.mxu0
      %v2047 = vadd.f32 0.0, %v2046
      %v2048 = vpop.f32.mrf.mxu0
      %v2049 = vpop.f32.mrf.mxu0
      %v2050 = vadd.f32 0.0, %v2049
      %v2051 = vpop.f32.mrf.mxu0
      %2052 = vdwg.mxu0
      %v2053 = vadd.f32 %v1825, %v1927
      %v2054 = vadd.f32 %v1826, %v1930
      %v2055 = vadd.f32 %v1827, %v1935
      %v2056 = vadd.f32 %v1828, %v1938
      %v2057 = vadd.f32 %v1829, %v1943
      %v2058 = vadd.f32 %v1830, %v1946
      %v2059 = vadd.f32 %v1831, %v1951
      %v2060 = vadd.f32 %v1832, %v1954
      %v2061 = vadd.f32 %v1833, %v1959
      %v2062 = vadd.f32 %v1834, %v1962
      %v2063 = vadd.f32 %v1835, %v1967
      %v2064 = vadd.f32 %v1836, %v1970
      %v2065 = vadd.f32 %v1837, %v1975
      %v2066 = vadd.f32 %v1838, %v1978
      %v2067 = vadd.f32 %v1839, %v1983
      %v2068 = vadd.f32 %v1840, %v1986
      %v2069 = vadd.f32 %v1841, %v1991
      %v2070 = vadd.f32 %v1842, %v1994
      %v2071 = vadd.f32 %v1843, %v1999
      %v2072 = vadd.f32 %v1844, %v2002
      %v2073 = vadd.f32 %v1845, %v2007
      %v2074 = vadd.f32 %v1846, %v2010
      %v2075 = vadd.f32 %v1847, %v2015
      %v2076 = vadd.f32 %v1848, %v2018
      %v2077 = vadd.f32 %v1849, %v2023
      %v2078 = vadd.f32 %v1850, %v2026
      %v2079 = vadd.f32 %v1851, %v2031
      %v2080 = vadd.f32 %v1852, %v2034
      %v2081 = vadd.f32 %v1853, %v2039
      %v2082 = vadd.f32 %v1854, %v2042
      %v2083 = vadd.f32 %v1855, %v2047
      %v2084 = vadd.f32 %v1856, %v2050
      %v2086 = vrot.slane %v276, 5
      %v2087 = vrot.slane %v2086, 4
      %v2088 = vrot.slane %v277, 5
      %v2089 = vsel %vm1244, %v2087, %v2088
      %v2090 = vrot.slane %v2088, 4
      %v2091 = vrot.slane %v278, 5
      %v2092 = vsel %vm1244, %v2090, %v2091
      %s2093 = scalar_lea.vmem %s1, 10
      %v2094 = vld [vmem:[%s2093] sm:$0x3]
      %v2095 = vunpack.c.l.b16 %v2089
      %v2096 = vunpack.c.l.b16 %v2092
      %v2097 = vpack.c.b16 %v2096, %v2095
      %v2099 = vsel %vm720, %v2097, 0
      %v2102 = vsel %vm769, %v2094, 0
      %2104 = vmatprep.subr.bf16.mxu0 0
      %2105 = vmatpush1.bf16.msra.mxu0 0
      %2106 = vmatprep.subr.bf16.mxu0 0
      %2107 = vmatpush1.bf16.msra.mxu0 0
      %2108 = vmatprep.subr.bf16.mxu0 0
      %2109 = vmatpush1.bf16.msra.mxu0 0
      %2110 = vmatprep.subr.bf16.mxu0 0
      %2111 = vmatpush1.bf16.msra.mxu0 0
      %2112 = vmatprep.subr.bf16.mxu0 0
      %2113 = vmatpush1.bf16.msra.mxu0 0
      %2114 = vmatprep.subr.bf16.mxu0 0
      %2115 = vmatpush1.bf16.msra.mxu0 0
      %2116 = vmatprep.subr.bf16.mxu0 0
      %2117 = vmatpush1.bf16.msra.mxu0 0
      %2118 = vmatprep.subr.bf16.mxu0 0
      %2119 = vmatpush1.bf16.msra.mxu0 %v2102
      %2120 = vmatprep.subr.bf16.mxu0 0
      %2121 = vmatpush2.bf16.msra.mxu0 0
      %2122 = vmatprep.subr.bf16.mxu0 0
      %2123 = vmatpush2.bf16.msra.mxu0 0
      %2124 = vmatprep.subr.bf16.mxu0 0
      %2125 = vmatpush2.bf16.msra.mxu0 0
      %2126 = vmatprep.subr.bf16.mxu0 0
      %2127 = vmatpush2.bf16.msra.mxu0 0
      %2128 = vmatprep.subr.bf16.mxu0 0
      %2129 = vmatpush2.bf16.msra.mxu0 0
      %2130 = vmatprep.subr.bf16.mxu0 0
      %2131 = vmatpush2.bf16.msra.mxu0 0
      %2132 = vmatprep.subr.bf16.mxu0 0
      %2133 = vmatpush2.bf16.msra.mxu0 0
      %2134 = vmatprep.subr.bf16.mxu0 0
      %2135 = vmatpush2.bf16.msra.mxu0 0
      %2136 = vmatprep.mubr.bf16.mxu0 0
      %2137 = vmatmul.mubr.bf16.gmra.mxu0 %v1411
      %v2138 = vpop.f32.mrf.mxu0
      %v2139 = vadd.f32 0.0, %v2138
      %v2140 = vpop.f32.mrf.mxu0
      %v2141 = vpop.f32.mrf.mxu0
      %v2142 = vadd.f32 0.0, %v2141
      %v2143 = vpop.f32.mrf.mxu0
      %2144 = vmatprep.mubr.bf16.mxu0 0
      %2145 = vmatmul.mubr.bf16.gmra.mxu0 %v1414
      %v2146 = vpop.f32.mrf.mxu0
      %v2147 = vadd.f32 0.0, %v2146
      %v2148 = vpop.f32.mrf.mxu0
      %v2149 = vpop.f32.mrf.mxu0
      %v2150 = vadd.f32 0.0, %v2149
      %v2151 = vpop.f32.mrf.mxu0
      %2152 = vmatprep.mubr.bf16.mxu0 0
      %2153 = vmatmul.mubr.bf16.gmra.mxu0 %v1417
      %v2154 = vpop.f32.mrf.mxu0
      %v2155 = vadd.f32 0.0, %v2154
      %v2156 = vpop.f32.mrf.mxu0
      %v2157 = vpop.f32.mrf.mxu0
      %v2158 = vadd.f32 0.0, %v2157
      %v2159 = vpop.f32.mrf.mxu0
      %2160 = vmatprep.mubr.bf16.mxu0 0
      %2161 = vmatmul.mubr.bf16.gmra.mxu0 %v1420
      %v2162 = vpop.f32.mrf.mxu0
      %v2163 = vadd.f32 0.0, %v2162
      %v2164 = vpop.f32.mrf.mxu0
      %v2165 = vpop.f32.mrf.mxu0
      %v2166 = vadd.f32 0.0, %v2165
      %v2167 = vpop.f32.mrf.mxu0
      %2168 = vmatprep.mubr.bf16.mxu0 0
      %2169 = vmatmul.mubr.bf16.gmra.mxu0 %v1423
      %v2170 = vpop.f32.mrf.mxu0
      %v2171 = vadd.f32 0.0, %v2170
      %v2172 = vpop.f32.mrf.mxu0
      %v2173 = vpop.f32.mrf.mxu0
      %v2174 = vadd.f32 0.0, %v2173
      %v2175 = vpop.f32.mrf.mxu0
      %2176 = vmatprep.mubr.bf16.mxu0 0
      %2177 = vmatmul.mubr.bf16.gmra.mxu0 %v1426
      %v2178 = vpop.f32.mrf.mxu0
      %v2179 = vadd.f32 0.0, %v2178
      %v2180 = vpop.f32.mrf.mxu0
      %v2181 = vpop.f32.mrf.mxu0
      %v2182 = vadd.f32 0.0, %v2181
      %v2183 = vpop.f32.mrf.mxu0
      %2184 = vmatprep.mubr.bf16.mxu0 0
      %2185 = vmatmul.mubr.bf16.gmra.mxu0 %v1429
      %v2186 = vpop.f32.mrf.mxu0
      %v2187 = vadd.f32 0.0, %v2186
      %v2188 = vpop.f32.mrf.mxu0
      %v2189 = vpop.f32.mrf.mxu0
      %v2190 = vadd.f32 0.0, %v2189
      %v2191 = vpop.f32.mrf.mxu0
      %2192 = vmatprep.mubr.bf16.mxu0 0
      %2193 = vmatmul.mubr.bf16.gmra.mxu0 %v1432
      %v2194 = vpop.f32.mrf.mxu0
      %v2195 = vadd.f32 0.0, %v2194
      %v2196 = vpop.f32.mrf.mxu0
      %v2197 = vpop.f32.mrf.mxu0
      %v2198 = vadd.f32 0.0, %v2197
      %v2199 = vpop.f32.mrf.mxu0
      %2200 = vmatprep.mubr.bf16.mxu0 0
      %2201 = vmatmul.mubr.bf16.gmra.mxu0 %v1435
      %v2202 = vpop.f32.mrf.mxu0
      %v2203 = vadd.f32 0.0, %v2202
      %v2204 = vpop.f32.mrf.mxu0
      %v2205 = vpop.f32.mrf.mxu0
      %v2206 = vadd.f32 0.0, %v2205
      %v2207 = vpop.f32.mrf.mxu0
      %2208 = vmatprep.mubr.bf16.mxu0 0
      %2209 = vmatmul.mubr.bf16.gmra.mxu0 %v1438
      %v2210 = vpop.f32.mrf.mxu0
      %v2211 = vadd.f32 0.0, %v2210
      %v2212 = vpop.f32.mrf.mxu0
      %v2213 = vpop.f32.mrf.mxu0
      %v2214 = vadd.f32 0.0, %v2213
      %v2215 = vpop.f32.mrf.mxu0
      %2216 = vmatprep.mubr.bf16.mxu0 0
      %2217 = vmatmul.mubr.bf16.gmra.mxu0 %v1441
      %v2218 = vpop.f32.mrf.mxu0
      %v2219 = vadd.f32 0.0, %v2218
      %v2220 = vpop.f32.mrf.mxu0
      %v2221 = vpop.f32.mrf.mxu0
      %v2222 = vadd.f32 0.0, %v2221
      %v2223 = vpop.f32.mrf.mxu0
      %2224 = vmatprep.mubr.bf16.mxu0 0
      %2225 = vmatmul.mubr.bf16.gmra.mxu0 %v1444
      %v2226 = vpop.f32.mrf.mxu0
      %v2227 = vadd.f32 0.0, %v2226
      %v2228 = vpop.f32.mrf.mxu0
      %v2229 = vpop.f32.mrf.mxu0
      %v2230 = vadd.f32 0.0, %v2229
      %v2231 = vpop.f32.mrf.mxu0
      %2232 = vmatprep.mubr.bf16.mxu0 0
      %2233 = vmatmul.mubr.bf16.gmra.mxu0 %v1447
      %v2234 = vpop.f32.mrf.mxu0
      %v2235 = vadd.f32 0.0, %v2234
      %v2236 = vpop.f32.mrf.mxu0
      %v2237 = vpop.f32.mrf.mxu0
      %v2238 = vadd.f32 0.0, %v2237
      %v2239 = vpop.f32.mrf.mxu0
      %2240 = vmatprep.mubr.bf16.mxu0 0
      %2241 = vmatmul.mubr.bf16.gmra.mxu0 %v1450
      %v2242 = vpop.f32.mrf.mxu0
      %v2243 = vadd.f32 0.0, %v2242
      %v2244 = vpop.f32.mrf.mxu0
      %v2245 = vpop.f32.mrf.mxu0
      %v2246 = vadd.f32 0.0, %v2245
      %v2247 = vpop.f32.mrf.mxu0
      %2248 = vmatprep.mubr.bf16.mxu0 0
      %2249 = vmatmul.mubr.bf16.gmra.mxu0 %v1453
      %v2250 = vpop.f32.mrf.mxu0
      %v2251 = vadd.f32 0.0, %v2250
      %v2252 = vpop.f32.mrf.mxu0
      %v2253 = vpop.f32.mrf.mxu0
      %v2254 = vadd.f32 0.0, %v2253
      %v2255 = vpop.f32.mrf.mxu0
      %2256 = vmatprep.mubr.bf16.mxu0 0
      %2257 = vmatmul.mubr.bf16.gmra.mxu0 %v2099
      %v2258 = vpop.f32.mrf.mxu0
      %v2259 = vadd.f32 0.0, %v2258
      %v2260 = vpop.f32.mrf.mxu0
      %v2261 = vpop.f32.mrf.mxu0
      %v2262 = vadd.f32 0.0, %v2261
      %v2263 = vpop.f32.mrf.mxu0
      %2264 = vdwg.mxu0
      %v2265 = vadd.f32 %v2053, %v2139
      %v2266 = vadd.f32 %v2054, %v2142
      %v2267 = vadd.f32 %v2055, %v2147
      %v2268 = vadd.f32 %v2056, %v2150
      %v2269 = vadd.f32 %v2057, %v2155
      %v2270 = vadd.f32 %v2058, %v2158
      %v2271 = vadd.f32 %v2059, %v2163
      %v2272 = vadd.f32 %v2060, %v2166
      %v2273 = vadd.f32 %v2061, %v2171
      %v2274 = vadd.f32 %v2062, %v2174
      %v2275 = vadd.f32 %v2063, %v2179
      %v2276 = vadd.f32 %v2064, %v2182
      %v2277 = vadd.f32 %v2065, %v2187
      %v2278 = vadd.f32 %v2066, %v2190
      %v2279 = vadd.f32 %v2067, %v2195
      %v2280 = vadd.f32 %v2068, %v2198
      %v2281 = vadd.f32 %v2069, %v2203
      %v2282 = vadd.f32 %v2070, %v2206
      %v2283 = vadd.f32 %v2071, %v2211
      %v2284 = vadd.f32 %v2072, %v2214
      %v2285 = vadd.f32 %v2073, %v2219
      %v2286 = vadd.f32 %v2074, %v2222
      %v2287 = vadd.f32 %v2075, %v2227
      %v2288 = vadd.f32 %v2076, %v2230
      %v2289 = vadd.f32 %v2077, %v2235
      %v2290 = vadd.f32 %v2078, %v2238
      %v2291 = vadd.f32 %v2079, %v2243
      %v2292 = vadd.f32 %v2080, %v2246
      %v2293 = vadd.f32 %v2081, %v2251
      %v2294 = vadd.f32 %v2082, %v2254
      %v2295 = vadd.f32 %v2083, %v2259
      %v2296 = vadd.f32 %v2084, %v2262
      %s2297 = scalar_lea.vmem %s1, 12
      %v2298 = vld [vmem:[%s2297] sm:$0x3]
      %v2301 = vunpack.c.l.b16 %v279
      %v2302 = vunpack.c.l.b16 %v280
      %v2303 = vpack.c.b16 %v2302, %v2301
      %v2305 = vsel %vm720, %v2303, 0
      %v2308 = vsel %vm769, %v2298, 0
      %2310 = vmatprep.subr.bf16.mxu0 0
      %2311 = vmatpush1.bf16.msra.mxu0 0
      %2312 = vmatprep.subr.bf16.mxu0 0
      %2313 = vmatpush1.bf16.msra.mxu0 0
      %2314 = vmatprep.subr.bf16.mxu0 0
      %2315 = vmatpush1.bf16.msra.mxu0 0
      %2316 = vmatprep.subr.bf16.mxu0 0
      %2317 = vmatpush1.bf16.msra.mxu0 0
      %2318 = vmatprep.subr.bf16.mxu0 0
      %2319 = vmatpush1.bf16.msra.mxu0 0
      %2320 = vmatprep.subr.bf16.mxu0 0
      %2321 = vmatpush1.bf16.msra.mxu0 0
      %2322 = vmatprep.subr.bf16.mxu0 0
      %2323 = vmatpush1.bf16.msra.mxu0 0
      %2324 = vmatprep.subr.bf16.mxu0 0
      %2325 = vmatpush1.bf16.msra.mxu0 %v2308
      %2326 = vmatprep.subr.bf16.mxu0 0
      %2327 = vmatpush2.bf16.msra.mxu0 0
      %2328 = vmatprep.subr.bf16.mxu0 0
      %2329 = vmatpush2.bf16.msra.mxu0 0
      %2330 = vmatprep.subr.bf16.mxu0 0
      %2331 = vmatpush2.bf16.msra.mxu0 0
      %2332 = vmatprep.subr.bf16.mxu0 0
      %2333 = vmatpush2.bf16.msra.mxu0 0
      %2334 = vmatprep.subr.bf16.mxu0 0
      %2335 = vmatpush2.bf16.msra.mxu0 0
      %2336 = vmatprep.subr.bf16.mxu0 0
      %2337 = vmatpush2.bf16.msra.mxu0 0
      %2338 = vmatprep.subr.bf16.mxu0 0
      %2339 = vmatpush2.bf16.msra.mxu0 0
      %2340 = vmatprep.subr.bf16.mxu0 0
      %2341 = vmatpush2.bf16.msra.mxu0 0
      %2342 = vmatprep.mubr.bf16.mxu0 0
      %2343 = vmatmul.mubr.bf16.gmra.mxu0 %v1021
      %v2344 = vpop.f32.mrf.mxu0
      %v2345 = vadd.f32 0.0, %v2344
      %v2346 = vpop.f32.mrf.mxu0
      %v2347 = vpop.f32.mrf.mxu0
      %v2348 = vadd.f32 0.0, %v2347
      %v2349 = vpop.f32.mrf.mxu0
      %2350 = vmatprep.mubr.bf16.mxu0 0
      %2351 = vmatmul.mubr.bf16.gmra.mxu0 %v1024
      %v2352 = vpop.f32.mrf.mxu0
      %v2353 = vadd.f32 0.0, %v2352
      %v2354 = vpop.f32.mrf.mxu0
      %v2355 = vpop.f32.mrf.mxu0
      %v2356 = vadd.f32 0.0, %v2355
      %v2357 = vpop.f32.mrf.mxu0
      %2358 = vmatprep.mubr.bf16.mxu0 0
      %2359 = vmatmul.mubr.bf16.gmra.mxu0 %v1027
      %v2360 = vpop.f32.mrf.mxu0
      %v2361 = vadd.f32 0.0, %v2360
      %v2362 = vpop.f32.mrf.mxu0
      %v2363 = vpop.f32.mrf.mxu0
      %v2364 = vadd.f32 0.0, %v2363
      %v2365 = vpop.f32.mrf.mxu0
      %2366 = vmatprep.mubr.bf16.mxu0 0
      %2367 = vmatmul.mubr.bf16.gmra.mxu0 %v1030
      %v2368 = vpop.f32.mrf.mxu0
      %v2369 = vadd.f32 0.0, %v2368
      %v2370 = vpop.f32.mrf.mxu0
      %v2371 = vpop.f32.mrf.mxu0
      %v2372 = vadd.f32 0.0, %v2371
      %v2373 = vpop.f32.mrf.mxu0
      %2374 = vmatprep.mubr.bf16.mxu0 0
      %2375 = vmatmul.mubr.bf16.gmra.mxu0 %v1033
      %v2376 = vpop.f32.mrf.mxu0
      %v2377 = vadd.f32 0.0, %v2376
      %v2378 = vpop.f32.mrf.mxu0
      %v2379 = vpop.f32.mrf.mxu0
      %v2380 = vadd.f32 0.0, %v2379
      %v2381 = vpop.f32.mrf.mxu0
      %2382 = vmatprep.mubr.bf16.mxu0 0
      %2383 = vmatmul.mubr.bf16.gmra.mxu0 %v1036
      %v2384 = vpop.f32.mrf.mxu0
      %v2385 = vadd.f32 0.0, %v2384
      %v2386 = vpop.f32.mrf.mxu0
      %v2387 = vpop.f32.mrf.mxu0
      %v2388 = vadd.f32 0.0, %v2387
      %v2389 = vpop.f32.mrf.mxu0
      %2390 = vmatprep.mubr.bf16.mxu0 0
      %2391 = vmatmul.mubr.bf16.gmra.mxu0 %v1039
      %v2392 = vpop.f32.mrf.mxu0
      %v2393 = vadd.f32 0.0, %v2392
      %v2394 = vpop.f32.mrf.mxu0
      %v2395 = vpop.f32.mrf.mxu0
      %v2396 = vadd.f32 0.0, %v2395
      %v2397 = vpop.f32.mrf.mxu0
      %2398 = vmatprep.mubr.bf16.mxu0 0
      %2399 = vmatmul.mubr.bf16.gmra.mxu0 %v1042
      %v2400 = vpop.f32.mrf.mxu0
      %v2401 = vadd.f32 0.0, %v2400
      %v2402 = vpop.f32.mrf.mxu0
      %v2403 = vpop.f32.mrf.mxu0
      %v2404 = vadd.f32 0.0, %v2403
      %v2405 = vpop.f32.mrf.mxu0
      %2406 = vmatprep.mubr.bf16.mxu0 0
      %2407 = vmatmul.mubr.bf16.gmra.mxu0 %v1045
      %v2408 = vpop.f32.mrf.mxu0
      %v2409 = vadd.f32 0.0, %v2408
      %v2410 = vpop.f32.mrf.mxu0
      %v2411 = vpop.f32.mrf.mxu0
      %v2412 = vadd.f32 0.0, %v2411
      %v2413 = vpop.f32.mrf.mxu0
      %2414 = vmatprep.mubr.bf16.mxu0 0
      %2415 = vmatmul.mubr.bf16.gmra.mxu0 %v1048
      %v2416 = vpop.f32.mrf.mxu0
      %v2417 = vadd.f32 0.0, %v2416
      %v2418 = vpop.f32.mrf.mxu0
      %v2419 = vpop.f32.mrf.mxu0
      %v2420 = vadd.f32 0.0, %v2419
      %v2421 = vpop.f32.mrf.mxu0
      %2422 = vmatprep.mubr.bf16.mxu0 0
      %2423 = vmatmul.mubr.bf16.gmra.mxu0 %v1051
      %v2424 = vpop.f32.mrf.mxu0
      %v2425 = vadd.f32 0.0, %v2424
      %v2426 = vpop.f32.mrf.mxu0
      %v2427 = vpop.f32.mrf.mxu0
      %v2428 = vadd.f32 0.0, %v2427
      %v2429 = vpop.f32.mrf.mxu0
      %2430 = vmatprep.mubr.bf16.mxu0 0
      %2431 = vmatmul.mubr.bf16.gmra.mxu0 %v1054
      %v2432 = vpop.f32.mrf.mxu0
      %v2433 = vadd.f32 0.0, %v2432
      %v2434 = vpop.f32.mrf.mxu0
      %v2435 = vpop.f32.mrf.mxu0
      %v2436 = vadd.f32 0.0, %v2435
      %v2437 = vpop.f32.mrf.mxu0
      %2438 = vmatprep.mubr.bf16.mxu0 0
      %2439 = vmatmul.mubr.bf16.gmra.mxu0 %v1057
      %v2440 = vpop.f32.mrf.mxu0
      %v2441 = vadd.f32 0.0, %v2440
      %v2442 = vpop.f32.mrf.mxu0
      %v2443 = vpop.f32.mrf.mxu0
      %v2444 = vadd.f32 0.0, %v2443
      %v2445 = vpop.f32.mrf.mxu0
      %2446 = vmatprep.mubr.bf16.mxu0 0
      %2447 = vmatmul.mubr.bf16.gmra.mxu0 %v1060
      %v2448 = vpop.f32.mrf.mxu0
      %v2449 = vadd.f32 0.0, %v2448
      %v2450 = vpop.f32.mrf.mxu0
      %v2451 = vpop.f32.mrf.mxu0
      %v2452 = vadd.f32 0.0, %v2451
      %v2453 = vpop.f32.mrf.mxu0
      %2454 = vmatprep.mubr.bf16.mxu0 0
      %2455 = vmatmul.mubr.bf16.gmra.mxu0 %v1659
      %v2456 = vpop.f32.mrf.mxu0
      %v2457 = vadd.f32 0.0, %v2456
      %v2458 = vpop.f32.mrf.mxu0
      %v2459 = vpop.f32.mrf.mxu0
      %v2460 = vadd.f32 0.0, %v2459
      %v2461 = vpop.f32.mrf.mxu0
      %2462 = vmatprep.mubr.bf16.mxu0 0
      %2463 = vmatmul.mubr.bf16.gmra.mxu0 %v2305
      %v2464 = vpop.f32.mrf.mxu0
      %v2465 = vadd.f32 0.0, %v2464
      %v2466 = vpop.f32.mrf.mxu0
      %v2467 = vpop.f32.mrf.mxu0
      %v2468 = vadd.f32 0.0, %v2467
      %v2469 = vpop.f32.mrf.mxu0
      %2470 = vdwg.mxu0
      %v2471 = vadd.f32 %v2265, %v2345
      %v2472 = vadd.f32 %v2266, %v2348
      %v2473 = vadd.f32 %v2267, %v2353
      %v2474 = vadd.f32 %v2268, %v2356
      %v2475 = vadd.f32 %v2269, %v2361
      %v2476 = vadd.f32 %v2270, %v2364
      %v2477 = vadd.f32 %v2271, %v2369
      %v2478 = vadd.f32 %v2272, %v2372
      %v2479 = vadd.f32 %v2273, %v2377
      %v2480 = vadd.f32 %v2274, %v2380
      %v2481 = vadd.f32 %v2275, %v2385
      %v2482 = vadd.f32 %v2276, %v2388
      %v2483 = vadd.f32 %v2277, %v2393
      %v2484 = vadd.f32 %v2278, %v2396
      %v2485 = vadd.f32 %v2279, %v2401
      %v2486 = vadd.f32 %v2280, %v2404
      %v2487 = vadd.f32 %v2281, %v2409
      %v2488 = vadd.f32 %v2282, %v2412
      %v2489 = vadd.f32 %v2283, %v2417
      %v2490 = vadd.f32 %v2284, %v2420
      %v2491 = vadd.f32 %v2285, %v2425
      %v2492 = vadd.f32 %v2286, %v2428
      %v2493 = vadd.f32 %v2287, %v2433
      %v2494 = vadd.f32 %v2288, %v2436
      %v2495 = vadd.f32 %v2289, %v2441
      %v2496 = vadd.f32 %v2290, %v2444
      %v2497 = vadd.f32 %v2291, %v2449
      %v2498 = vadd.f32 %v2292, %v2452
      %v2499 = vadd.f32 %v2293, %v2457
      %v2500 = vadd.f32 %v2294, %v2460
      %v2501 = vadd.f32 %v2295, %v2465
      %v2502 = vadd.f32 %v2296, %v2468
      %v2504 = vshrl.u32 %v279, 16
      %v2506 = vrot.slane %v2504, 4
      %v2507 = vshll.u32 %v279, 16
      %v2509 = vrot.slane %v2507, 5
      %v2510 = vor.u32 %v2506, %v2509
      %v2511 = vrot.slane %v2510, 4
      %v2513 = vshll.u32 %v280, 16
      %v2515 = vrot.slane %v2513, 5
      %v2516 = vsel %vm285, %v2511, %v2515
      %v2517 = vshrl.u32 %v280, 16
      %v2519 = vrot.slane %v2517, 4
      %v2520 = vor.u32 %v2519, %v2515
      %v2521 = vrot.slane %v2520, 4
      %v2523 = vshll.u32 %v281, 16
      %v2525 = vrot.slane %v2523, 5
      %v2526 = vsel %vm285, %v2521, %v2525
      %s2527 = scalar_lea.vmem %s1, 14
      %v2528 = vld [vmem:[%s2527] sm:$0x3]
      %v2529 = vunpack.c.l.b16 %v2516
      %v2530 = vunpack.c.l.b16 %v2526
      %v2531 = vpack.c.b16 %v2530, %v2529
      %v2533 = vsel %vm720, %v2531, 0
      %v2536 = vsel %vm769, %v2528, 0
      %2538 = vmatprep.subr.bf16.mxu0 0
      %2539 = vmatpush1.bf16.msra.mxu0 0
      %2540 = vmatprep.subr.bf16.mxu0 0
      %2541 = vmatpush1.bf16.msra.mxu0 0
      %2542 = vmatprep.subr.bf16.mxu0 0
      %2543 = vmatpush1.bf16.msra.mxu0 0
      %2544 = vmatprep.subr.bf16.mxu0 0
      %2545 = vmatpush1.bf16.msra.mxu0 0
      %2546 = vmatprep.subr.bf16.mxu0 0
      %2547 = vmatpush1.bf16.msra.mxu0 0
      %2548 = vmatprep.subr.bf16.mxu0 0
      %2549 = vmatpush1.bf16.msra.mxu0 0
      %2550 = vmatprep.subr.bf16.mxu0 0
      %2551 = vmatpush1.bf16.msra.mxu0 0
      %2552 = vmatprep.subr.bf16.mxu0 0
      %2553 = vmatpush1.bf16.msra.mxu0 %v2536
      %2554 = vmatprep.subr.bf16.mxu0 0
      %2555 = vmatpush2.bf16.msra.mxu0 0
      %2556 = vmatprep.subr.bf16.mxu0 0
      %2557 = vmatpush2.bf16.msra.mxu0 0
      %2558 = vmatprep.subr.bf16.mxu0 0
      %2559 = vmatpush2.bf16.msra.mxu0 0
      %2560 = vmatprep.subr.bf16.mxu0 0
      %2561 = vmatpush2.bf16.msra.mxu0 0
      %2562 = vmatprep.subr.bf16.mxu0 0
      %2563 = vmatpush2.bf16.msra.mxu0 0
      %2564 = vmatprep.subr.bf16.mxu0 0
      %2565 = vmatpush2.bf16.msra.mxu0 0
      %2566 = vmatprep.subr.bf16.mxu0 0
      %2567 = vmatpush2.bf16.msra.mxu0 0
      %2568 = vmatprep.subr.bf16.mxu0 0
      %2569 = vmatpush2.bf16.msra.mxu0 0
      %2570 = vmatprep.mubr.bf16.mxu0 0
      %2571 = vmatmul.mubr.bf16.gmra.mxu0 %v728
      %v2572 = vpop.f32.mrf.mxu0
      %v2573 = vadd.f32 0.0, %v2572
      %v2574 = vpop.f32.mrf.mxu0
      %v2575 = vpop.f32.mrf.mxu0
      %v2576 = vadd.f32 0.0, %v2575
      %v2577 = vpop.f32.mrf.mxu0
      %2578 = vmatprep.mubr.bf16.mxu0 0
      %2579 = vmatmul.mubr.bf16.gmra.mxu0 %v731
      %v2580 = vpop.f32.mrf.mxu0
      %v2581 = vadd.f32 0.0, %v2580
      %v2582 = vpop.f32.mrf.mxu0
      %v2583 = vpop.f32.mrf.mxu0
      %v2584 = vadd.f32 0.0, %v2583
      %v2585 = vpop.f32.mrf.mxu0
      %2586 = vmatprep.mubr.bf16.mxu0 0
      %2587 = vmatmul.mubr.bf16.gmra.mxu0 %v734
      %v2588 = vpop.f32.mrf.mxu0
      %v2589 = vadd.f32 0.0, %v2588
      %v2590 = vpop.f32.mrf.mxu0
      %v2591 = vpop.f32.mrf.mxu0
      %v2592 = vadd.f32 0.0, %v2591
      %v2593 = vpop.f32.mrf.mxu0
      %2594 = vmatprep.mubr.bf16.mxu0 0
      %2595 = vmatmul.mubr.bf16.gmra.mxu0 %v737
      %v2596 = vpop.f32.mrf.mxu0
      %v2597 = vadd.f32 0.0, %v2596
      %v2598 = vpop.f32.mrf.mxu0
      %v2599 = vpop.f32.mrf.mxu0
      %v2600 = vadd.f32 0.0, %v2599
      %v2601 = vpop.f32.mrf.mxu0
      %2602 = vmatprep.mubr.bf16.mxu0 0
      %2603 = vmatmul.mubr.bf16.gmra.mxu0 %v740
      %v2604 = vpop.f32.mrf.mxu0
      %v2605 = vadd.f32 0.0, %v2604
      %v2606 = vpop.f32.mrf.mxu0
      %v2607 = vpop.f32.mrf.mxu0
      %v2608 = vadd.f32 0.0, %v2607
      %v2609 = vpop.f32.mrf.mxu0
      %2610 = vmatprep.mubr.bf16.mxu0 0
      %2611 = vmatmul.mubr.bf16.gmra.mxu0 %v743
      %v2612 = vpop.f32.mrf.mxu0
      %v2613 = vadd.f32 0.0, %v2612
      %v2614 = vpop.f32.mrf.mxu0
      %v2615 = vpop.f32.mrf.mxu0
      %v2616 = vadd.f32 0.0, %v2615
      %v2617 = vpop.f32.mrf.mxu0
      %2618 = vmatprep.mubr.bf16.mxu0 0
      %2619 = vmatmul.mubr.bf16.gmra.mxu0 %v746
      %v2620 = vpop.f32.mrf.mxu0
      %v2621 = vadd.f32 0.0, %v2620
      %v2622 = vpop.f32.mrf.mxu0
      %v2623 = vpop.f32.mrf.mxu0
      %v2624 = vadd.f32 0.0, %v2623
      %v2625 = vpop.f32.mrf.mxu0
      %2626 = vmatprep.mubr.bf16.mxu0 0
      %2627 = vmatmul.mubr.bf16.gmra.mxu0 %v749
      %v2628 = vpop.f32.mrf.mxu0
      %v2629 = vadd.f32 0.0, %v2628
      %v2630 = vpop.f32.mrf.mxu0
      %v2631 = vpop.f32.mrf.mxu0
      %v2632 = vadd.f32 0.0, %v2631
      %v2633 = vpop.f32.mrf.mxu0
      %2634 = vmatprep.mubr.bf16.mxu0 0
      %2635 = vmatmul.mubr.bf16.gmra.mxu0 %v752
      %v2636 = vpop.f32.mrf.mxu0
      %v2637 = vadd.f32 0.0, %v2636
      %v2638 = vpop.f32.mrf.mxu0
      %v2639 = vpop.f32.mrf.mxu0
      %v2640 = vadd.f32 0.0, %v2639
      %v2641 = vpop.f32.mrf.mxu0
      %2642 = vmatprep.mubr.bf16.mxu0 0
      %2643 = vmatmul.mubr.bf16.gmra.mxu0 %v755
      %v2644 = vpop.f32.mrf.mxu0
      %v2645 = vadd.f32 0.0, %v2644
      %v2646 = vpop.f32.mrf.mxu0
      %v2647 = vpop.f32.mrf.mxu0
      %v2648 = vadd.f32 0.0, %v2647
      %v2649 = vpop.f32.mrf.mxu0
      %2650 = vmatprep.mubr.bf16.mxu0 0
      %2651 = vmatmul.mubr.bf16.gmra.mxu0 %v758
      %v2652 = vpop.f32.mrf.mxu0
      %v2653 = vadd.f32 0.0, %v2652
      %v2654 = vpop.f32.mrf.mxu0
      %v2655 = vpop.f32.mrf.mxu0
      %v2656 = vadd.f32 0.0, %v2655
      %v2657 = vpop.f32.mrf.mxu0
      %2658 = vmatprep.mubr.bf16.mxu0 0
      %2659 = vmatmul.mubr.bf16.gmra.mxu0 %v761
      %v2660 = vpop.f32.mrf.mxu0
      %v2661 = vadd.f32 0.0, %v2660
      %v2662 = vpop.f32.mrf.mxu0
      %v2663 = vpop.f32.mrf.mxu0
      %v2664 = vadd.f32 0.0, %v2663
      %v2665 = vpop.f32.mrf.mxu0
      %2666 = vmatprep.mubr.bf16.mxu0 0
      %2667 = vmatmul.mubr.bf16.gmra.mxu0 %v764
      %v2668 = vpop.f32.mrf.mxu0
      %v2669 = vadd.f32 0.0, %v2668
      %v2670 = vpop.f32.mrf.mxu0
      %v2671 = vpop.f32.mrf.mxu0
      %v2672 = vadd.f32 0.0, %v2671
      %v2673 = vpop.f32.mrf.mxu0
      %2674 = vmatprep.mubr.bf16.mxu0 0
      %2675 = vmatmul.mubr.bf16.gmra.mxu0 %v767
      %v2676 = vpop.f32.mrf.mxu0
      %v2677 = vadd.f32 0.0, %v2676
      %v2678 = vpop.f32.mrf.mxu0
      %v2679 = vpop.f32.mrf.mxu0
      %v2680 = vadd.f32 0.0, %v2679
      %v2681 = vpop.f32.mrf.mxu0
      %2682 = vmatprep.mubr.bf16.mxu0 0
      %2683 = vmatmul.mubr.bf16.gmra.mxu0 %v1887
      %v2684 = vpop.f32.mrf.mxu0
      %v2685 = vadd.f32 0.0, %v2684
      %v2686 = vpop.f32.mrf.mxu0
      %v2687 = vpop.f32.mrf.mxu0
      %v2688 = vadd.f32 0.0, %v2687
      %v2689 = vpop.f32.mrf.mxu0
      %2690 = vmatprep.mubr.bf16.mxu0 0
      %2691 = vmatmul.mubr.bf16.gmra.mxu0 %v2533
      %v2692 = vpop.f32.mrf.mxu0
      %v2693 = vadd.f32 0.0, %v2692
      %v2694 = vpop.f32.mrf.mxu0
      %v2695 = vpop.f32.mrf.mxu0
      %v2696 = vadd.f32 0.0, %v2695
      %v2697 = vpop.f32.mrf.mxu0
      %2698 = vdwg.mxu0
      %v2699 = vadd.f32 %v2471, %v2573
      %v2700 = vadd.f32 %v2472, %v2576
      %v2701 = vadd.f32 %v2473, %v2581
      %v2702 = vadd.f32 %v2474, %v2584
      %v2703 = vadd.f32 %v2475, %v2589
      %v2704 = vadd.f32 %v2476, %v2592
      %v2705 = vadd.f32 %v2477, %v2597
      %v2706 = vadd.f32 %v2478, %v2600
      %v2707 = vadd.f32 %v2479, %v2605
      %v2708 = vadd.f32 %v2480, %v2608
      %v2709 = vadd.f32 %v2481, %v2613
      %v2710 = vadd.f32 %v2482, %v2616
      %v2711 = vadd.f32 %v2483, %v2621
      %v2712 = vadd.f32 %v2484, %v2624
      %v2713 = vadd.f32 %v2485, %v2629
      %v2714 = vadd.f32 %v2486, %v2632
      %v2715 = vadd.f32 %v2487, %v2637
      %v2716 = vadd.f32 %v2488, %v2640
      %v2717 = vadd.f32 %v2489, %v2645
      %v2718 = vadd.f32 %v2490, %v2648
      %v2719 = vadd.f32 %v2491, %v2653
      %v2720 = vadd.f32 %v2492, %v2656
      %v2721 = vadd.f32 %v2493, %v2661
      %v2722 = vadd.f32 %v2494, %v2664
      %v2723 = vadd.f32 %v2495, %v2669
      %v2724 = vadd.f32 %v2496, %v2672
      %v2725 = vadd.f32 %v2497, %v2677
      %v2726 = vadd.f32 %v2498, %v2680
      %v2727 = vadd.f32 %v2499, %v2685
      %v2728 = vadd.f32 %v2500, %v2688
      %v2729 = vadd.f32 %v2501, %v2693
      %v2730 = vadd.f32 %v2502, %v2696
      %v2732 = vrot.slane %v279, 5
      %v2733 = vrot.slane %v2732, 4
      %v2734 = vrot.slane %v280, 5
      %v2735 = vsel %vm1244, %v2733, %v2734
      %v2736 = vrot.slane %v2734, 4
      %v2737 = vrot.slane %v281, 5
      %v2738 = vsel %vm1244, %v2736, %v2737
      %s2739 = scalar_lea.vmem %s1, 16
      %v2740 = vld [vmem:[%s2739] sm:$0x3]
      %v2741 = vunpack.c.l.b16 %v2735
      %v2742 = vunpack.c.l.b16 %v2738
      %v2743 = vpack.c.b16 %v2742, %v2741
      %v2745 = vsel %vm720, %v2743, 0
      %v2748 = vsel %vm769, %v2740, 0
      %2750 = vmatprep.subr.bf16.mxu0 0
      %2751 = vmatpush1.bf16.msra.mxu0 0
      %2752 = vmatprep.subr.bf16.mxu0 0
      %2753 = vmatpush1.bf16.msra.mxu0 0
      %2754 = vmatprep.subr.bf16.mxu0 0
      %2755 = vmatpush1.bf16.msra.mxu0 0
      %2756 = vmatprep.subr.bf16.mxu0 0
      %2757 = vmatpush1.bf16.msra.mxu0 0
      %2758 = vmatprep.subr.bf16.mxu0 0
      %2759 = vmatpush1.bf16.msra.mxu0 0
      %2760 = vmatprep.subr.bf16.mxu0 0
      %2761 = vmatpush1.bf16.msra.mxu0 0
      %2762 = vmatprep.subr.bf16.mxu0 0
      %2763 = vmatpush1.bf16.msra.mxu0 0
      %2764 = vmatprep.subr.bf16.mxu0 0
      %2765 = vmatpush1.bf16.msra.mxu0 %v2748
      %2766 = vmatprep.subr.bf16.mxu0 0
      %2767 = vmatpush2.bf16.msra.mxu0 0
      %2768 = vmatprep.subr.bf16.mxu0 0
      %2769 = vmatpush2.bf16.msra.mxu0 0
      %2770 = vmatprep.subr.bf16.mxu0 0
      %2771 = vmatpush2.bf16.msra.mxu0 0
      %2772 = vmatprep.subr.bf16.mxu0 0
      %2773 = vmatpush2.bf16.msra.mxu0 0
      %2774 = vmatprep.subr.bf16.mxu0 0
      %2775 = vmatpush2.bf16.msra.mxu0 0
      %2776 = vmatprep.subr.bf16.mxu0 0
      %2777 = vmatpush2.bf16.msra.mxu0 0
      %2778 = vmatprep.subr.bf16.mxu0 0
      %2779 = vmatpush2.bf16.msra.mxu0 0
      %2780 = vmatprep.subr.bf16.mxu0 0
      %2781 = vmatpush2.bf16.msra.mxu0 0
      %2782 = vmatprep.mubr.bf16.mxu0 0
      %2783 = vmatmul.mubr.bf16.gmra.mxu0 %v1414
      %v2784 = vpop.f32.mrf.mxu0
      %v2785 = vadd.f32 0.0, %v2784
      %v2786 = vpop.f32.mrf.mxu0
      %v2787 = vpop.f32.mrf.mxu0
      %v2788 = vadd.f32 0.0, %v2787
      %v2789 = vpop.f32.mrf.mxu0
      %2790 = vmatprep.mubr.bf16.mxu0 0
      %2791 = vmatmul.mubr.bf16.gmra.mxu0 %v1417
      %v2792 = vpop.f32.mrf.mxu0
      %v2793 = vadd.f32 0.0, %v2792
      %v2794 = vpop.f32.mrf.mxu0
      %v2795 = vpop.f32.mrf.mxu0
      %v2796 = vadd.f32 0.0, %v2795
      %v2797 = vpop.f32.mrf.mxu0
      %2798 = vmatprep.mubr.bf16.mxu0 0
      %2799 = vmatmul.mubr.bf16.gmra.mxu0 %v1420
      %v2800 = vpop.f32.mrf.mxu0
      %v2801 = vadd.f32 0.0, %v2800
      %v2802 = vpop.f32.mrf.mxu0
      %v2803 = vpop.f32.mrf.mxu0
      %v2804 = vadd.f32 0.0, %v2803
      %v2805 = vpop.f32.mrf.mxu0
      %2806 = vmatprep.mubr.bf16.mxu0 0
      %2807 = vmatmul.mubr.bf16.gmra.mxu0 %v1423
      %v2808 = vpop.f32.mrf.mxu0
      %v2809 = vadd.f32 0.0, %v2808
      %v2810 = vpop.f32.mrf.mxu0
      %v2811 = vpop.f32.mrf.mxu0
      %v2812 = vadd.f32 0.0, %v2811
      %v2813 = vpop.f32.mrf.mxu0
      %2814 = vmatprep.mubr.bf16.mxu0 0
      %2815 = vmatmul.mubr.bf16.gmra.mxu0 %v1426
      %v2816 = vpop.f32.mrf.mxu0
      %v2817 = vadd.f32 0.0, %v2816
      %v2818 = vpop.f32.mrf.mxu0
      %v2819 = vpop.f32.mrf.mxu0
      %v2820 = vadd.f32 0.0, %v2819
      %v2821 = vpop.f32.mrf.mxu0
      %2822 = vmatprep.mubr.bf16.mxu0 0
      %2823 = vmatmul.mubr.bf16.gmra.mxu0 %v1429
      %v2824 = vpop.f32.mrf.mxu0
      %v2825 = vadd.f32 0.0, %v2824
      %v2826 = vpop.f32.mrf.mxu0
      %v2827 = vpop.f32.mrf.mxu0
      %v2828 = vadd.f32 0.0, %v2827
      %v2829 = vpop.f32.mrf.mxu0
      %2830 = vmatprep.mubr.bf16.mxu0 0
      %2831 = vmatmul.mubr.bf16.gmra.mxu0 %v1432
      %v2832 = vpop.f32.mrf.mxu0
      %v2833 = vadd.f32 0.0, %v2832
      %v2834 = vpop.f32.mrf.mxu0
      %v2835 = vpop.f32.mrf.mxu0
      %v2836 = vadd.f32 0.0, %v2835
      %v2837 = vpop.f32.mrf.mxu0
      %2838 = vmatprep.mubr.bf16.mxu0 0
      %2839 = vmatmul.mubr.bf16.gmra.mxu0 %v1435
      %v2840 = vpop.f32.mrf.mxu0
      %v2841 = vadd.f32 0.0, %v2840
      %v2842 = vpop.f32.mrf.mxu0
      %v2843 = vpop.f32.mrf.mxu0
      %v2844 = vadd.f32 0.0, %v2843
      %v2845 = vpop.f32.mrf.mxu0
      %2846 = vmatprep.mubr.bf16.mxu0 0
      %2847 = vmatmul.mubr.bf16.gmra.mxu0 %v1438
      %v2848 = vpop.f32.mrf.mxu0
      %v2849 = vadd.f32 0.0, %v2848
      %v2850 = vpop.f32.mrf.mxu0
      %v2851 = vpop.f32.mrf.mxu0
      %v2852 = vadd.f32 0.0, %v2851
      %v2853 = vpop.f32.mrf.mxu0
      %2854 = vmatprep.mubr.bf16.mxu0 0
      %2855 = vmatmul.mubr.bf16.gmra.mxu0 %v1441
      %v2856 = vpop.f32.mrf.mxu0
      %v2857 = vadd.f32 0.0, %v2856
      %v2858 = vpop.f32.mrf.mxu0
      %v2859 = vpop.f32.mrf.mxu0
      %v2860 = vadd.f32 0.0, %v2859
      %v2861 = vpop.f32.mrf.mxu0
      %2862 = vmatprep.mubr.bf16.mxu0 0
      %2863 = vmatmul.mubr.bf16.gmra.mxu0 %v1444
      %v2864 = vpop.f32.mrf.mxu0
      %v2865 = vadd.f32 0.0, %v2864
      %v2866 = vpop.f32.mrf.mxu0
      %v2867 = vpop.f32.mrf.mxu0
      %v2868 = vadd.f32 0.0, %v2867
      %v2869 = vpop.f32.mrf.mxu0
      %2870 = vmatprep.mubr.bf16.mxu0 0
      %2871 = vmatmul.mubr.bf16.gmra.mxu0 %v1447
      %v2872 = vpop.f32.mrf.mxu0
      %v2873 = vadd.f32 0.0, %v2872
      %v2874 = vpop.f32.mrf.mxu0
      %v2875 = vpop.f32.mrf.mxu0
      %v2876 = vadd.f32 0.0, %v2875
      %v2877 = vpop.f32.mrf.mxu0
      %2878 = vmatprep.mubr.bf16.mxu0 0
      %2879 = vmatmul.mubr.bf16.gmra.mxu0 %v1450
      %v2880 = vpop.f32.mrf.mxu0
      %v2881 = vadd.f32 0.0, %v2880
      %v2882 = vpop.f32.mrf.mxu0
      %v2883 = vpop.f32.mrf.mxu0
      %v2884 = vadd.f32 0.0, %v2883
      %v2885 = vpop.f32.mrf.mxu0
      %2886 = vmatprep.mubr.bf16.mxu0 0
      %2887 = vmatmul.mubr.bf16.gmra.mxu0 %v1453
      %v2888 = vpop.f32.mrf.mxu0
      %v2889 = vadd.f32 0.0, %v2888
      %v2890 = vpop.f32.mrf.mxu0
      %v2891 = vpop.f32.mrf.mxu0
      %v2892 = vadd.f32 0.0, %v2891
      %v2893 = vpop.f32.mrf.mxu0
      %2894 = vmatprep.mubr.bf16.mxu0 0
      %2895 = vmatmul.mubr.bf16.gmra.mxu0 %v2099
      %v2896 = vpop.f32.mrf.mxu0
      %v2897 = vadd.f32 0.0, %v2896
      %v2898 = vpop.f32.mrf.mxu0
      %v2899 = vpop.f32.mrf.mxu0
      %v2900 = vadd.f32 0.0, %v2899
      %v2901 = vpop.f32.mrf.mxu0
      %2902 = vmatprep.mubr.bf16.mxu0 0
      %2903 = vmatmul.mubr.bf16.gmra.mxu0 %v2745
      %v2904 = vpop.f32.mrf.mxu0
      %v2905 = vadd.f32 0.0, %v2904
      %v2906 = vpop.f32.mrf.mxu0
      %v2907 = vpop.f32.mrf.mxu0
      %v2908 = vadd.f32 0.0, %v2907
      %v2909 = vpop.f32.mrf.mxu0
      %2910 = vdwg.mxu0
      %v2911 = vadd.f32 %v2699, %v2785
      %v2912 = vadd.f32 %v2700, %v2788
      %v2913 = vadd.f32 %v2701, %v2793
      %v2914 = vadd.f32 %v2702, %v2796
      %v2915 = vadd.f32 %v2703, %v2801
      %v2916 = vadd.f32 %v2704, %v2804
      %v2917 = vadd.f32 %v2705, %v2809
      %v2918 = vadd.f32 %v2706, %v2812
      %v2919 = vadd.f32 %v2707, %v2817
      %v2920 = vadd.f32 %v2708, %v2820
      %v2921 = vadd.f32 %v2709, %v2825
      %v2922 = vadd.f32 %v2710, %v2828
      %v2923 = vadd.f32 %v2711, %v2833
      %v2924 = vadd.f32 %v2712, %v2836
      %v2925 = vadd.f32 %v2713, %v2841
      %v2926 = vadd.f32 %v2714, %v2844
      %v2927 = vadd.f32 %v2715, %v2849
      %v2928 = vadd.f32 %v2716, %v2852
      %v2929 = vadd.f32 %v2717, %v2857
      %v2930 = vadd.f32 %v2718, %v2860
      %v2931 = vadd.f32 %v2719, %v2865
      %v2932 = vadd.f32 %v2720, %v2868
      %v2933 = vadd.f32 %v2721, %v2873
      %v2934 = vadd.f32 %v2722, %v2876
      %v2935 = vadd.f32 %v2723, %v2881
      %v2936 = vadd.f32 %v2724, %v2884
      %v2937 = vadd.f32 %v2725, %v2889
      %v2938 = vadd.f32 %v2726, %v2892
      %v2939 = vadd.f32 %v2727, %v2897
      %v2940 = vadd.f32 %v2728, %v2900
      %v2941 = vadd.f32 %v2729, %v2905
      %v2942 = vadd.f32 %v2730, %v2908
      %v2943 = vld [vmem:[%s2] sm:$0x1]
      %v2945 = vlaneseq
      %v2946 = vshrl.u32 %v2945, 7
      %v2947 = vsub.s32 0, %v2946
      %v2948 = vrot.slane %v2943, %v2947
      %v2950 = vmul.f32 %v2911, %v2948
      %v2951 = vmul.f32 %v2912, %v2948
      %v2952 = vmul.f32 %v2913, %v2948
      %v2953 = vmul.f32 %v2914, %v2948
      %v2954 = vmul.f32 %v2915, %v2948
      %v2955 = vmul.f32 %v2916, %v2948
      %v2956 = vmul.f32 %v2917, %v2948
      %v2957 = vmul.f32 %v2918, %v2948
      %v2958 = vmul.f32 %v2919, %v2948
      %v2959 = vmul.f32 %v2920, %v2948
      %v2960 = vmul.f32 %v2921, %v2948
      %v2961 = vmul.f32 %v2922, %v2948
      %v2962 = vmul.f32 %v2923, %v2948
      %v2963 = vmul.f32 %v2924, %v2948
      %v2964 = vmul.f32 %v2925, %v2948
      %v2965 = vmul.f32 %v2926, %v2948
      %v2966 = vmul.f32 %v2927, %v2948
      %v2967 = vmul.f32 %v2928, %v2948
      %v2968 = vmul.f32 %v2929, %v2948
      %v2969 = vmul.f32 %v2930, %v2948
      %v2970 = vmul.f32 %v2931, %v2948
      %v2971 = vmul.f32 %v2932, %v2948
      %v2972 = vmul.f32 %v2933, %v2948
      %v2973 = vmul.f32 %v2934, %v2948
      %v2974 = vmul.f32 %v2935, %v2948
      %v2975 = vmul.f32 %v2936, %v2948
      %v2976 = vmul.f32 %v2937, %v2948
      %v2977 = vmul.f32 %v2938, %v2948
      %v2978 = vmul.f32 %v2939, %v2948
      %v2979 = vmul.f32 %v2940, %v2948
      %v2980 = vmul.f32 %v2941, %v2948
      %v2981 = vmul.f32 %v2942, %v2948
      %v2982 = vld [vmem:[%s3] sm:$0x1]
      %v2984 = vlaneseq
      %v2985 = vshrl.u32 %v2984, 7
      %v2986 = vsub.s32 0, %v2985
      %v2987 = vrot.slane %v2982, %v2986
      %v2989 = vadd.f32 %v2950, %v2987
      %v2990 = vadd.f32 %v2951, %v2987
      %v2991 = vadd.f32 %v2952, %v2987
      %v2992 = vadd.f32 %v2953, %v2987
      %v2993 = vadd.f32 %v2954, %v2987
      %v2994 = vadd.f32 %v2955, %v2987
      %v2995 = vadd.f32 %v2956, %v2987
      %v2996 = vadd.f32 %v2957, %v2987
      %v2997 = vadd.f32 %v2958, %v2987
      %v2998 = vadd.f32 %v2959, %v2987
      %v2999 = vadd.f32 %v2960, %v2987
      %v3000 = vadd.f32 %v2961, %v2987
      %v3001 = vadd.f32 %v2962, %v2987
      %v3002 = vadd.f32 %v2963, %v2987
      %v3003 = vadd.f32 %v2964, %v2987
      %v3004 = vadd.f32 %v2965, %v2987
      %v3005 = vadd.f32 %v2966, %v2987
      %v3006 = vadd.f32 %v2967, %v2987
      %v3007 = vadd.f32 %v2968, %v2987
      %v3008 = vadd.f32 %v2969, %v2987
      %v3009 = vadd.f32 %v2970, %v2987
      %v3010 = vadd.f32 %v2971, %v2987
      %v3011 = vadd.f32 %v2972, %v2987
      %v3012 = vadd.f32 %v2973, %v2987
      %v3013 = vadd.f32 %v2974, %v2987
      %v3014 = vadd.f32 %v2975, %v2987
      %v3015 = vadd.f32 %v2976, %v2987
      %v3016 = vadd.f32 %v2977, %v2987
      %v3017 = vadd.f32 %v2978, %v2987
      %v3018 = vadd.f32 %v2979, %v2987
      %v3019 = vadd.f32 %v2980, %v2987
      %v3020 = vadd.f32 %v2981, %v2987
      %v3021 = vmax.f32 %v2989, 0.0
      %v3022 = vmax.f32 %v2990, 0.0
      %v3023 = vmax.f32 %v2991, 0.0
      %v3024 = vmax.f32 %v2992, 0.0
      %v3025 = vmax.f32 %v2993, 0.0
      %v3026 = vmax.f32 %v2994, 0.0
      %v3027 = vmax.f32 %v2995, 0.0
      %v3028 = vmax.f32 %v2996, 0.0
      %v3029 = vmax.f32 %v2997, 0.0
      %v3030 = vmax.f32 %v2998, 0.0
      %v3031 = vmax.f32 %v2999, 0.0
      %v3032 = vmax.f32 %v3000, 0.0
      %v3033 = vmax.f32 %v3001, 0.0
      %v3034 = vmax.f32 %v3002, 0.0
      %v3035 = vmax.f32 %v3003, 0.0
      %v3036 = vmax.f32 %v3004, 0.0
      %v3037 = vmax.f32 %v3005, 0.0
      %v3038 = vmax.f32 %v3006, 0.0
      %v3039 = vmax.f32 %v3007, 0.0
      %v3040 = vmax.f32 %v3008, 0.0
      %v3041 = vmax.f32 %v3009, 0.0
      %v3042 = vmax.f32 %v3010, 0.0
      %v3043 = vmax.f32 %v3011, 0.0
      %v3044 = vmax.f32 %v3012, 0.0
      %v3045 = vmax.f32 %v3013, 0.0
      %v3046 = vmax.f32 %v3014, 0.0
      %v3047 = vmax.f32 %v3015, 0.0
      %v3048 = vmax.f32 %v3016, 0.0
      %v3049 = vmax.f32 %v3017, 0.0
      %v3050 = vmax.f32 %v3018, 0.0
      %v3051 = vmax.f32 %v3019, 0.0
      %v3052 = vmax.f32 %v3020, 0.0
      %v3053 = vmin.f32 %v3021, 6.0
      %v3054 = vmin.f32 %v3022, 6.0
      %v3055 = vmin.f32 %v3023, 6.0
      %v3056 = vmin.f32 %v3024, 6.0
      %v3057 = vmin.f32 %v3025, 6.0
      %v3058 = vmin.f32 %v3026, 6.0
      %v3059 = vmin.f32 %v3027, 6.0
      %v3060 = vmin.f32 %v3028, 6.0
      %v3061 = vmin.f32 %v3029, 6.0
      %v3062 = vmin.f32 %v3030, 6.0
      %v3063 = vmin.f32 %v3031, 6.0
      %v3064 = vmin.f32 %v3032, 6.0
      %v3065 = vmin.f32 %v3033, 6.0
      %v3066 = vmin.f32 %v3034, 6.0
      %v3067 = vmin.f32 %v3035, 6.0
      %v3068 = vmin.f32 %v3036, 6.0
      %v3069 = vmin.f32 %v3037, 6.0
      %v3070 = vmin.f32 %v3038, 6.0
      %v3071 = vmin.f32 %v3039, 6.0
      %v3072 = vmin.f32 %v3040, 6.0
      %v3073 = vmin.f32 %v3041, 6.0
      %v3074 = vmin.f32 %v3042, 6.0
      %v3075 = vmin.f32 %v3043, 6.0
      %v3076 = vmin.f32 %v3044, 6.0
      %v3077 = vmin.f32 %v3045, 6.0
      %v3078 = vmin.f32 %v3046, 6.0
      %v3079 = vmin.f32 %v3047, 6.0
      %v3080 = vmin.f32 %v3048, 6.0
      %v3081 = vmin.f32 %v3049, 6.0
      %v3082 = vmin.f32 %v3050, 6.0
      %v3083 = vmin.f32 %v3051, 6.0
      %v3084 = vmin.f32 %v3052, 6.0
      %3085 = vst [vmem:[%s221] sm:$0xff] %v3053
      %3086 = vst [vmem:[%s221 + $0x8] sm:$0xff] %v3054
      %3087 = vst [vmem:[%s221 + $0x10] sm:$0xff] %v3055
      %3088 = vst [vmem:[%s221 + $0x18] sm:$0xff] %v3056
      %3089 = vst [vmem:[%s221 + $0x20] sm:$0xff] %v3057
      %3090 = vst [vmem:[%s221 + $0x28] sm:$0xff] %v3058
      %3091 = vst [vmem:[%s221 + $0x30] sm:$0xff] %v3059
      %3092 = vst [vmem:[%s221 + $0x38] sm:$0xff] %v3060
      %3093 = vst [vmem:[%s221 + $0x40] sm:$0xff] %v3061
      %3094 = vst [vmem:[%s221 + $0x48] sm:$0xff] %v3062
      %3095 = vst [vmem:[%s221 + $0x50] sm:$0xff] %v3063
      %3096 = vst [vmem:[%s221 + $0x58] sm:$0xff] %v3064
      %3097 = vst [vmem:[%s221 + $0x60] sm:$0xff] %v3065
      %3098 = vst [vmem:[%s221 + $0x68] sm:$0xff] %v3066
      %3099 = vst [vmem:[%s221 + $0x70] sm:$0xff] %v3067
      %3100 = vst [vmem:[%s221 + $0x78] sm:$0xff] %v3068
      %3101 = vst [vmem:[%s221 + $0x80] sm:$0xff] %v3069
      %3102 = vst [vmem:[%s221 + $0x88] sm:$0xff] %v3070
      %3103 = vst [vmem:[%s221 + $0x90] sm:$0xff] %v3071
      %3104 = vst [vmem:[%s221 + $0x98] sm:$0xff] %v3072
      %3105 = vst [vmem:[%s221 + $0xa0] sm:$0xff] %v3073
      %3106 = vst [vmem:[%s221 + $0xa8] sm:$0xff] %v3074
      %3107 = vst [vmem:[%s221 + $0xb0] sm:$0xff] %v3075
      %3108 = vst [vmem:[%s221 + $0xb8] sm:$0xff] %v3076
      %3109 = vst [vmem:[%s221 + $0xc0] sm:$0xff] %v3077
      %3110 = vst [vmem:[%s221 + $0xc8] sm:$0xff] %v3078
      %3111 = vst [vmem:[%s221 + $0xd0] sm:$0xff] %v3079
      %3112 = vst [vmem:[%s221 + $0xd8] sm:$0xff] %v3080
      %3113 = vst [vmem:[%s221 + $0xe0] sm:$0xff] %v3081
      %3114 = vst [vmem:[%s221 + $0xe8] sm:$0xff] %v3082
      %3115 = vst [vmem:[%s221 + $0xf0] sm:$0xff] %v3083
      %3116 = vst [vmem:[%s221 + $0xf8] sm:$0xff] %v3084
      %s3117 = smul.u32 16, %s20
      %p3118 = scmp.lt.s32.totalorder %s19, 1
      %s3119 = scalar_select %p3118, %s19, 1
      %p3120 = scmp.lt.s32.totalorder %s3117, 15
      %s3121 = scalar_select %p3120, %s3117, 15
      %s3122 = smul.addr %s3121, 2
      %s3123 = smul.addr %s3119, 32
      %s3124 = sadd.s32 %s3122, %s3123
      %s3125 = smul.addr %s3124, 8
      %s3126 = scalar_lea.vmem %s4, %s3125
      // Predicated region
      $region37: #{conv2d_3x3_forward.1} parent=35 // pred_check
        %p3127 = pneg %p136
      $region38: #{conv2d_3x3_forward.1} parent=35 // pred_check_branch
        %3129 = sbr.rel (%p3127) target = $region40
      $region39: #{conv2d_3x3_forward.1} parent=35 // pred_region
        %s3130 = smul.u32 16, %s20
      $region40: #{conv2d_3x3_forward.1} parent=35 // pred_fallthru
        _
    $region36: #{conv2d_3x3_forward.1} parent=5 // pred_fallthru
      _
    %p3131 = scmp.le.s32.totalorder 2, %s10
    // Predicated region
    $region41: #{conv2d_3x3_forward.1} parent=5 // pred_check
      %p3132 = pneg %p3131
    $region42: #{conv2d_3x3_forward.1} parent=5 // pred_check_branch
      %3134 = sbr.rel (%p3132) target = $region44
    $region43: #{conv2d_3x3_forward.1} parent=5 // pred_region
      %s3135 = ssub.s32 %s10, 2
      // Predicated region
      $region45: #{conv2d_3x3_forward.1} parent=43 // pred_check
        %p3136 = pneg %p142
      $region46: #{conv2d_3x3_forward.1} parent=43 // pred_check_branch
        %3138 = sbr.rel (%p3136) target = $region48
      $region47: #{conv2d_3x3_forward.1} parent=43 // pred_region
        %s3139 = smul.u32 16, %s22
        %p3140 = scmp.lt.s32.totalorder %s21, 1
        %s3141 = scalar_select %p3140, %s21, 1
        %p3142 = scmp.lt.s32.totalorder %s3139, 15
        %s3143 = scalar_select %p3142, %s3139, 15
        %s3144 = smul.addr %s3143, 2
        %s3145 = smul.addr %s3141, 32
        %s3146 = sadd.s32 %s3144, %s3145
        %s3147 = smul.addr %s3146, 8
        %s3148 = scalar_lea.vmem %s4, %s3147
      $region48: #{conv2d_3x3_forward.1} parent=43 // pred_fallthru
        _
    $region44: #{conv2d_3x3_forward.1} parent=5 // pred_fallthru
      _
  $region6: #{conv2d_3x3_forward.1} parent=0 // loop_footer
    %s14 = sadd.s32 1, %s10
  $region7: #{conv2d_3x3_forward.1} parent=0 // loop_footer_branch
    %9 = sbr.rel target = $region3
  $region8: #{conv2d_3x3_forward.1} parent=0 // loop_exit
    _

</llo_original>
